<compile_context>
chip_gen: v6e
topology: v6e:2x2x1
jax: 0.10.0
libtpu: 0.0.40
codegen_flags: <defaults>
</compile_context>

<pallas_src>
import jax
import jax.numpy as jnp
from jax.experimental import pallas as pl
from jax.experimental.pallas import tpu as pltpu

SIGMA = 1.0    # Gaussian matching-degree bandwidth
EPS = 1e-12    # guard against exactly-zero denominators


def _sublane_prod(x):
    """Product over axis 0 (sublanes) of a (K, C) array -> (1, C).

    For power-of-two K uses a log2(K)-step roll-and-multiply butterfly: the
    rotations run on the XLU slot (otherwise idle here) and every multiply is a
    full-sublane VALU op."""
    k = x.shape[0]
    if k > 1 and (k & (k - 1)) == 0:
        shift = k // 2
        while shift >= 1:
            x = x * pltpu.roll(x, shift=shift, axis=0)
            shift //= 2
        return x[0:1, :]
    return jnp.prod(x, axis=0, keepdims=True)


def make_brb_kernel(chunk):
    def brb_kernel(xT_ref, aref_ref, dbar_ref, ltheta_ref, beta_ref, bsum_ref,
                   out_ref):
        # xT:     (A, TB)  input features, batch on lanes
        # aref:   (K, A)   rule reference (center) values
        # dbar:   (K, A)   normalized attribute weights (precomputed)
        # ltheta: (K, 1)   log(theta) (precomputed)
        # beta:   (K, H)   rule belief degrees
        # bsum:   (K, 1)   sum_j beta[k, j] (precomputed)
        aref = aref_ref[...].astype(jnp.float32)
        dbar = dbar_ref[...].astype(jnp.float32)
        ltheta = ltheta_ref[...].astype(jnp.float32)
        beta = beta_ref[...].astype(jnp.float32)
        bsum = bsum_ref[...].astype(jnp.float32)

        K, A = aref.shape
        H = beta.shape[1]
        TB = out_ref.shape[1]
        n_chunks = TB // chunk
        coef = -0.5 / (SIGMA * SIGMA)

        def compute_chunk(start):
            xc = xT_ref[:, pl.ds(start, chunk)].astype(jnp.float32)   # (A, C)

            # ---- Rule_weight_layer ------------------------------------------
            # s[k,b] = sum_i dbar[k,i] * (x[i,b] - aref[k,i])^2  (tiny VPU loop)
            s = jnp.zeros((K, chunk), jnp.float32)
            for i in range(A):                        # A is tiny & static
                d = xc[i:i + 1, :] - aref[:, i:i + 1]
                s = s + dbar[:, i:i + 1] * d * d
            # theta folded into the exponent: exp(-s/2sigma^2 + log theta)
            num = jnp.exp(s * coef + ltheta)          # (K, C) = theta*alpha
            denom = jnp.sum(num, axis=0, keepdims=True) + EPS   # (1, C)
            r = pl.reciprocal(denom, approx=True)     # EUP slot
            r = r * (2.0 - denom * r)                 # one Newton step -> ~exact
            w = num * r                               # (K, C) normalized weights

            # ---- Rule_belief_layer (ER aggregation), full-sublane work ------
            c_ = 1.0 - w * bsum                       # (K, C)
            w1 = 1.0 - w                              # (K, C)
            t2 = _sublane_prod(c_)                    # (1, C)
            t3 = _sublane_prod(w1)                    # (1, C)

            t1_rows = []
            for n in range(H):                        # H is tiny & static
                f_n = w * beta[:, n:n + 1] + c_       # (K, C)
                t1_rows.append(_sublane_prod(f_n))    # (1, C)
            t1 = jnp.concatenate(t1_rows, axis=0)     # (H, C)
            sum_t1 = t1_rows[0]
            for n in range(1, H):
                sum_t1 = sum_t1 + t1_rows[n]          # (1, C)

            # Exact divides for the cancellation-prone denominators.
            mu = 1.0 / (sum_t1 - (H - 1.0) * t2 + EPS)          # (1, C)
            p = (mu * (t1 - t2)) / (1.0 - mu * t3 + EPS)        # (H, C)
            out_ref[:, pl.ds(start, chunk)] = p.astype(out_ref.dtype)

        # Fully-unrolled lane-chunk loop: bounds the per-chunk vreg working set
        # (~30-40 vregs) while the DMA tile stays large.  Static, 128-aligned
        # offsets => unmasked aligned vector loads/stores.
        for ci in range(n_chunks):
            compute_chunk(ci * chunk)

    return brb_kernel


def brb_forward(x, aref, delta, theta, beta, *, max_block_b=2048, chunk=512):
    """x: (B, A); returns p_n: (B, H)."""
    B, A = x.shape
    K, H = beta.shape
    assert chunk % 128 == 0 and max_block_b % chunk == 0

    # ---- derived parameters, precomputed once (outside the kernel) ----------
    delta_bar = (delta / jnp.max(delta, axis=1, keepdims=True)).astype(jnp.float32)
    log_theta = jnp.log(jnp.maximum(theta, 1e-30)).reshape(K, 1).astype(jnp.float32)
    bsum = jnp.sum(beta, axis=1, keepdims=True).astype(jnp.float32)   # (K, 1)
    beta_f = beta.astype(jnp.float32)                                 # (K, H)
    aref_f = aref.astype(jnp.float32)                                 # (K, A)

    # ---- batch tile choice ---------------------------------------------------
    # Biggest tile up to max_block_b (multiple of `chunk`), but keep >= 2 grid
    # steps when the batch allows so dimension_semantics=("parallel",) can shard
    # the batch across both TensorCores on v7x.  On v5e/v6e the grid is just a
    # serial loop, so fewer/larger steps are also what we want there.
    if B > chunk:
        half = -(-B // 2)                       # cdiv(B, 2)
        blk = -(-half // chunk) * chunk         # round up to a chunk multiple
        block_b = max(chunk, min(max_block_b, blk))
    else:
        block_b = chunk
    n_blk = pl.cdiv(B, block_b)
    Bp = n_blk * block_b

    # Batch on the lane axis -> lane-dense math and unmasked output stores.
    # (A ~ 4, so this transpose is tiny.)  Pad with jnp.pad so garbage lanes
    # never flow through exp/products.
    xT = x.T.astype(jnp.float32)                # (A, B)
    if Bp != B:
        xT = jnp.pad(xT, ((0, 0), (0, Bp - B)))

    out_t = pl.pallas_call(
        make_brb_kernel(chunk),
        out_shape=jax.ShapeDtypeStruct((H, Bp), jnp.float32),
        grid_spec=pltpu.PrefetchScalarGridSpec(
            num_scalar_prefetch=0,
            grid=(n_blk,),
            in_specs=[
                pl.BlockSpec((A, block_b), lambda i: (0, i)),   # x tile (streamed)
                pl.BlockSpec((K, A), lambda i: (0, 0)),         # A_ref (untiled)
                pl.BlockSpec((K, A), lambda i: (0, 0)),         # delta_bar
                pl.BlockSpec((K, 1), lambda i: (0, 0)),         # log(theta)
                pl.BlockSpec((K, H), lambda i: (0, 0)),         # beta
                pl.BlockSpec((K, 1), lambda i: (0, 0)),         # sum_j beta[k,j]
            ],
            out_specs=pl.BlockSpec((H, block_b), lambda i: (0, i)),
        ),
        compiler_params=pltpu.CompilerParams(
            dimension_semantics=("parallel",),
        ),
    )(xT, aref_f, delta_bar, log_theta, beta_f, bsum)

    # Layout plumbing back to the module's (B, H) contract (H ~ 4, cheap).
    return out_t[:, :B].T


def init_params(key, num_k, num_A, num_h):
    """Deterministic parameter init mirroring the module's __init__ shapes."""
    k1, k2, k3, k4 = jax.random.split(key, 4)
    theta = jax.random.uniform(k1, (num_k,), jnp.float32, 0.1, 1.0)
    delta = jax.random.uniform(k2, (num_k, num_A), jnp.float32, 0.1, 1.0)
    aref = jax.random.uniform(k3, (num_k, num_A), jnp.float32, -1.0, 1.0)
    beta_raw = jax.random.uniform(k4, (num_k, num_h), jnp.float32, 0.0, 1.0)
    beta = beta_raw / jnp.sum(beta_raw, axis=1, keepdims=True)
    return aref, delta, theta, beta


def brb_reference(x, aref, delta, theta, beta):
    """Pure-JAX reference with identical semantics (exact divides)."""
    delta_bar = delta / jnp.max(delta, axis=1, keepdims=True)           # (K, A)
    diff = x[:, None, :] - aref[None, :, :]                             # (B, K, A)
    s = jnp.sum(delta_bar[None, :, :] * diff * diff, axis=-1)           # (B, K)
    alpha = jnp.exp(-s / (2.0 * SIGMA * SIGMA))
    num = theta[None, :] * alpha
    w = num / jnp.sum(num, axis=1, keepdims=True)                       # (B, K)

    bsum = jnp.sum(beta, axis=1)                                        # (K,)
    f = w[:, :, None] * beta[None, :, :] + 1.0 - (w * bsum[None, :])[:, :, None]
    t1 = jnp.prod(f, axis=1)                                            # (B, H)
    t2 = jnp.prod(1.0 - w * bsum[None, :], axis=1, keepdims=True)       # (B, 1)
    t3 = jnp.prod(1.0 - w, axis=1, keepdims=True)                       # (B, 1)
    H = beta.shape[1]
    mu = 1.0 / (jnp.sum(t1, axis=1, keepdims=True) - (H - 1) * t2)
    return mu * (t1 - t2) / (1.0 - mu * t3)


if __name__ == "__main__":
    # Shapes consistent with the module: x is [batch, num_A]; rule/attr/hyp
    # counts are small in BRB models.
    num_A, num_k, num_h = 4, 8, 4

    key = jax.random.PRNGKey(0)
    kx, kp, kx2 = jax.random.split(key, 3)
    aref, delta, theta, beta = init_params(kp, num_k, num_A, num_h)

    # Case 1: batch large enough to exercise 2 grid steps x 2 lane chunks/step.
    batch = 2048
    x = jax.random.uniform(kx, (batch, num_A), jnp.float32, -1.0, 1.0)
    p_n = jax.block_until_ready(brb_forward(x, aref, delta, theta, beta))
    assert p_n.shape == (batch, num_h)
    assert bool(jnp.all(jnp.isfinite(p_n)))
    p_ref = brb_reference(x, aref, delta, theta, beta)
    # exact divides + Newton-refined vrcp -> tolerance tightened vs previous 2e-2
    assert bool(jnp.allclose(p_n, p_ref, rtol=5e-3, atol=5e-4))

    # Case 2: ragged batch exercising the jnp.pad path and a single grid step.
    batch2 = 300
    x2 = jax.random.uniform(kx2, (batch2, num_A), jnp.float32, -1.0, 1.0)
    p2 = jax.block_until_ready(brb_forward(x2, aref, delta, theta, beta))
    assert p2.shape == (batch2, num_h)
    assert bool(jnp.all(jnp.isfinite(p2)))
    p2_ref = brb_reference(x2, aref, delta, theta, beta)
    assert bool(jnp.allclose(p2, p2_ref, rtol=5e-3, atol=5e-4))

    # TODO(synk): exact Rule_weight_layer / Rule_belief_layer source was not
    # provided; standard BRB/ER semantics were reconstructed (see header).
    print("KERNEL_OK")
</pallas_src>

<mosaic_0001>
module attributes {stable_mosaic.version = 11 : i64} {
  func.func @brb_kernel(%arg0: i32, %arg1: memref<4x1024xf32, #tpu.memory_space<vmem>>, %arg2: memref<8x4xf32, #tpu.memory_space<vmem>>, %arg3: memref<8x4xf32, #tpu.memory_space<vmem>>, %arg4: memref<8x1xf32, #tpu.memory_space<vmem>>, %arg5: memref<8x4xf32, #tpu.memory_space<vmem>>, %arg6: memref<8x1xf32, #tpu.memory_space<vmem>>, %arg7: memref<4x1024xf32, #tpu.memory_space<vmem>>) attributes {dimension_semantics = [#tpu.dimension_semantics<parallel>], iteration_bounds = array<i64: 2>, scalar_prefetch = 0 : i64, scratch_operands = 0 : i64, tpu.core_type = #tpu.core_type<tc>, window_params = [{transform_indices = @transform_0, window_bounds = array<i64: 4, 1024>}, {pipeline_mode = #tpu.pipeline_mode<synchronous>, transform_indices = @transform_1, window_bounds = array<i64: 8, 4>}, {pipeline_mode = #tpu.pipeline_mode<synchronous>, transform_indices = @transform_2, window_bounds = array<i64: 8, 4>}, {pipeline_mode = #tpu.pipeline_mode<synchronous>, transform_indices = @transform_3, window_bounds = array<i64: 8, 1>}, {pipeline_mode = #tpu.pipeline_mode<synchronous>, transform_indices = @transform_4, window_bounds = array<i64: 8, 4>}, {pipeline_mode = #tpu.pipeline_mode<synchronous>, transform_indices = @transform_5, window_bounds = array<i64: 8, 1>}, {transform_indices = @transform_6, window_bounds = array<i64: 4, 1024>}]} {
    %c0 = arith.constant 0 : index
    %c0_0 = arith.constant 0 : index
    %0 = vector.load %arg2[%c0, %c0_0] : memref<8x4xf32, #tpu.memory_space<vmem>>, vector<8x4xf32>
    %c0_1 = arith.constant 0 : index
    %c0_2 = arith.constant 0 : index
    %1 = vector.load %arg3[%c0_1, %c0_2] : memref<8x4xf32, #tpu.memory_space<vmem>>, vector<8x4xf32>
    %c0_3 = arith.constant 0 : index
    %c0_4 = arith.constant 0 : index
    %2 = vector.load %arg4[%c0_3, %c0_4] : memref<8x1xf32, #tpu.memory_space<vmem>>, vector<8x1xf32>
    %c0_5 = arith.constant 0 : index
    %c0_6 = arith.constant 0 : index
    %3 = vector.load %arg5[%c0_5, %c0_6] : memref<8x4xf32, #tpu.memory_space<vmem>>, vector<8x4xf32>
    %c0_7 = arith.constant 0 : index
    %c0_8 = arith.constant 0 : index
    %4 = vector.load %arg6[%c0_7, %c0_8] : memref<8x1xf32, #tpu.memory_space<vmem>>, vector<8x1xf32>
    %c0_9 = arith.constant 0 : index
    %c0_10 = arith.constant 0 : index
    %5 = vector.load %arg1[%c0_9, %c0_10] : memref<4x1024xf32, #tpu.memory_space<vmem>>, vector<4x512xf32>
    %cst = arith.constant 0.000000e+00 : f32
    %6 = vector.broadcast %cst : f32 to vector<8x512xf32>
    %7 = vector.extract_strided_slice %5 {offsets = [0, 0], sizes = [1, 512], strides = [1, 1]} : vector<4x512xf32> to vector<1x512xf32>
    %8 = vector.extract_strided_slice %0 {offsets = [0, 0], sizes = [8, 1], strides = [1, 1]} : vector<8x4xf32> to vector<8x1xf32>
    %9 = vector.broadcast %7 : vector<1x512xf32> to vector<8x512xf32>
    %10 = vector.broadcast %8 : vector<8x1xf32> to vector<8x512xf32>
    %11 = arith.subf %9, %10 : vector<8x512xf32>
    %12 = vector.extract_strided_slice %1 {offsets = [0, 0], sizes = [8, 1], strides = [1, 1]} : vector<8x4xf32> to vector<8x1xf32>
    %13 = vector.broadcast %12 : vector<8x1xf32> to vector<8x512xf32>
    %14 = arith.mulf %13, %11 : vector<8x512xf32>
    %15 = arith.mulf %14, %11 : vector<8x512xf32>
    %16 = arith.addf %6, %15 : vector<8x512xf32>
    %17 = vector.extract_strided_slice %5 {offsets = [1, 0], sizes = [1, 512], strides = [1, 1]} : vector<4x512xf32> to vector<1x512xf32>
    %18 = vector.extract_strided_slice %0 {offsets = [0, 1], sizes = [8, 1], strides = [1, 1]} : vector<8x4xf32> to vector<8x1xf32>
    %19 = vector.broadcast %17 : vector<1x512xf32> to vector<8x512xf32>
    %20 = vector.broadcast %18 : vector<8x1xf32> to vector<8x512xf32>
    %21 = arith.subf %19, %20 : vector<8x512xf32>
    %22 = vector.extract_strided_slice %1 {offsets = [0, 1], sizes = [8, 1], strides = [1, 1]} : vector<8x4xf32> to vector<8x1xf32>
    %23 = vector.broadcast %22 : vector<8x1xf32> to vector<8x512xf32>
    %24 = arith.mulf %23, %21 : vector<8x512xf32>
    %25 = arith.mulf %24, %21 : vector<8x512xf32>
    %26 = arith.addf %16, %25 : vector<8x512xf32>
    %27 = vector.extract_strided_slice %5 {offsets = [2, 0], sizes = [1, 512], strides = [1, 1]} : vector<4x512xf32> to vector<1x512xf32>
    %28 = vector.extract_strided_slice %0 {offsets = [0, 2], sizes = [8, 1], strides = [1, 1]} : vector<8x4xf32> to vector<8x1xf32>
    %29 = vector.broadcast %27 : vector<1x512xf32> to vector<8x512xf32>
    %30 = vector.broadcast %28 : vector<8x1xf32> to vector<8x512xf32>
    %31 = arith.subf %29, %30 : vector<8x512xf32>
    %32 = vector.extract_strided_slice %1 {offsets = [0, 2], sizes = [8, 1], strides = [1, 1]} : vector<8x4xf32> to vector<8x1xf32>
    %33 = vector.broadcast %32 : vector<8x1xf32> to vector<8x512xf32>
    %34 = arith.mulf %33, %31 : vector<8x512xf32>
    %35 = arith.mulf %34, %31 : vector<8x512xf32>
    %36 = arith.addf %26, %35 : vector<8x512xf32>
    %37 = vector.extract_strided_slice %5 {offsets = [3, 0], sizes = [1, 512], strides = [1, 1]} : vector<4x512xf32> to vector<1x512xf32>
    %38 = vector.extract_strided_slice %0 {offsets = [0, 3], sizes = [8, 1], strides = [1, 1]} : vector<8x4xf32> to vector<8x1xf32>
    %39 = vector.broadcast %37 : vector<1x512xf32> to vector<8x512xf32>
    %40 = vector.broadcast %38 : vector<8x1xf32> to vector<8x512xf32>
    %41 = arith.subf %39, %40 : vector<8x512xf32>
    %42 = vector.extract_strided_slice %1 {offsets = [0, 3], sizes = [8, 1], strides = [1, 1]} : vector<8x4xf32> to vector<8x1xf32>
    %43 = vector.broadcast %42 : vector<8x1xf32> to vector<8x512xf32>
    %44 = arith.mulf %43, %41 : vector<8x512xf32>
    %45 = arith.mulf %44, %41 : vector<8x512xf32>
    %46 = arith.addf %36, %45 : vector<8x512xf32>
    %cst_11 = arith.constant -5.000000e-01 : f32
    %47 = vector.broadcast %cst_11 : f32 to vector<8x512xf32>
    %48 = arith.mulf %46, %47 : vector<8x512xf32>
    %49 = vector.broadcast %2 : vector<8x1xf32> to vector<8x512xf32>
    %50 = arith.addf %48, %49 : vector<8x512xf32>
    %51 = math.exp %50 : vector<8x512xf32>
    %cst_12 = arith.constant dense<0.000000e+00> : vector<512xf32>
    %52 = vector.multi_reduction <add>, %51, %cst_12 [0] : vector<8x512xf32> to vector<512xf32>
    %53 = vector.shape_cast %52 : vector<512xf32> to vector<1x512xf32>
    %cst_13 = arith.constant 9.99999996E-13 : f32
    %54 = vector.broadcast %cst_13 : f32 to vector<1x512xf32>
    %55 = arith.addf %53, %54 : vector<1x512xf32>
    %56 = tpu.reciprocal %55 {approx = true} : vector<1x512xf32> -> vector<1x512xf32>
    %57 = arith.mulf %55, %56 : vector<1x512xf32>
    %cst_14 = arith.constant 2.000000e+00 : f32
    %58 = vector.broadcast %cst_14 : f32 to vector<1x512xf32>
    %59 = arith.subf %58, %57 : vector<1x512xf32>
    %60 = arith.mulf %56, %59 : vector<1x512xf32>
    %61 = vector.broadcast %60 : vector<1x512xf32> to vector<8x512xf32>
    %62 = arith.mulf %51, %61 : vector<8x512xf32>
    %63 = vector.broadcast %4 : vector<8x1xf32> to vector<8x512xf32>
    %64 = arith.mulf %62, %63 : vector<8x512xf32>
    %cst_15 = arith.constant 1.000000e+00 : f32
    %65 = vector.broadcast %cst_15 : f32 to vector<8x512xf32>
    %66 = arith.subf %65, %64 : vector<8x512xf32>
    %cst_16 = arith.constant 1.000000e+00 : f32
    %67 = vector.broadcast %cst_16 : f32 to vector<8x512xf32>
    %68 = arith.subf %67, %62 : vector<8x512xf32>
    %c4_i32 = arith.constant 4 : i32
    %69 = tpu.dynamic_rotate %66 by %c4_i32 dim 0 : vector<8x512xf32>, i32 -> vector<8x512xf32>
    %70 = arith.mulf %66, %69 : vector<8x512xf32>
    %c2_i32 = arith.constant 2 : i32
    %71 = tpu.dynamic_rotate %70 by %c2_i32 dim 0 : vector<8x512xf32>, i32 -> vector<8x512xf32>
    %72 = arith.mulf %70, %71 : vector<8x512xf32>
    %c1_i32 = arith.constant 1 : i32
    %73 = tpu.dynamic_rotate %72 by %c1_i32 dim 0 : vector<8x512xf32>, i32 -> vector<8x512xf32>
    %74 = arith.mulf %72, %73 : vector<8x512xf32>
    %75 = vector.extract_strided_slice %74 {offsets = [0, 0], sizes = [1, 512], strides = [1, 1]} : vector<8x512xf32> to vector<1x512xf32>
    %c4_i32_17 = arith.constant 4 : i32
    %76 = tpu.dynamic_rotate %68 by %c4_i32_17 dim 0 : vector<8x512xf32>, i32 -> vector<8x512xf32>
    %77 = arith.mulf %68, %76 : vector<8x512xf32>
    %c2_i32_18 = arith.constant 2 : i32
    %78 = tpu.dynamic_rotate %77 by %c2_i32_18 dim 0 : vector<8x512xf32>, i32 -> vector<8x512xf32>
    %79 = arith.mulf %77, %78 : vector<8x512xf32>
    %c1_i32_19 = arith.constant 1 : i32
    %80 = tpu.dynamic_rotate %79 by %c1_i32_19 dim 0 : vector<8x512xf32>, i32 -> vector<8x512xf32>
    %81 = arith.mulf %79, %80 : vector<8x512xf32>
    %82 = vector.extract_strided_slice %81 {offsets = [0, 0], sizes = [1, 512], strides = [1, 1]} : vector<8x512xf32> to vector<1x512xf32>
    %83 = vector.extract_strided_slice %3 {offsets = [0, 0], sizes = [8, 1], strides = [1, 1]} : vector<8x4xf32> to vector<8x1xf32>
    %84 = vector.broadcast %83 : vector<8x1xf32> to vector<8x512xf32>
    %85 = arith.mulf %62, %84 : vector<8x512xf32>
    %86 = arith.addf %85, %66 : vector<8x512xf32>
    %c4_i32_20 = arith.constant 4 : i32
    %87 = tpu.dynamic_rotate %86 by %c4_i32_20 dim 0 : vector<8x512xf32>, i32 -> vector<8x512xf32>
    %88 = arith.mulf %86, %87 : vector<8x512xf32>
    %c2_i32_21 = arith.constant 2 : i32
    %89 = tpu.dynamic_rotate %88 by %c2_i32_21 dim 0 : vector<8x512xf32>, i32 -> vector<8x512xf32>
    %90 = arith.mulf %88, %89 : vector<8x512xf32>
    %c1_i32_22 = arith.constant 1 : i32
    %91 = tpu.dynamic_rotate %90 by %c1_i32_22 dim 0 : vector<8x512xf32>, i32 -> vector<8x512xf32>
    %92 = arith.mulf %90, %91 : vector<8x512xf32>
    %93 = vector.extract_strided_slice %92 {offsets = [0, 0], sizes = [1, 512], strides = [1, 1]} : vector<8x512xf32> to vector<1x512xf32>
    %94 = vector.extract_strided_slice %3 {offsets = [0, 1], sizes = [8, 1], strides = [1, 1]} : vector<8x4xf32> to vector<8x1xf32>
    %95 = vector.broadcast %94 : vector<8x1xf32> to vector<8x512xf32>
    %96 = arith.mulf %62, %95 : vector<8x512xf32>
    %97 = arith.addf %96, %66 : vector<8x512xf32>
    %c4_i32_23 = arith.constant 4 : i32
    %98 = tpu.dynamic_rotate %97 by %c4_i32_23 dim 0 : vector<8x512xf32>, i32 -> vector<8x512xf32>
    %99 = arith.mulf %97, %98 : vector<8x512xf32>
    %c2_i32_24 = arith.constant 2 : i32
    %100 = tpu.dynamic_rotate %99 by %c2_i32_24 dim 0 : vector<8x512xf32>, i32 -> vector<8x512xf32>
    %101 = arith.mulf %99, %100 : vector<8x512xf32>
    %c1_i32_25 = arith.constant 1 : i32
    %102 = tpu.dynamic_rotate %101 by %c1_i32_25 dim 0 : vector<8x512xf32>, i32 -> vector<8x512xf32>
    %103 = arith.mulf %101, %102 : vector<8x512xf32>
    %104 = vector.extract_strided_slice %103 {offsets = [0, 0], sizes = [1, 512], strides = [1, 1]} : vector<8x512xf32> to vector<1x512xf32>
    %105 = vector.extract_strided_slice %3 {offsets = [0, 2], sizes = [8, 1], strides = [1, 1]} : vector<8x4xf32> to vector<8x1xf32>
    %106 = vector.broadcast %105 : vector<8x1xf32> to vector<8x512xf32>
    %107 = arith.mulf %62, %106 : vector<8x512xf32>
    %108 = arith.addf %107, %66 : vector<8x512xf32>
    %c4_i32_26 = arith.constant 4 : i32
    %109 = tpu.dynamic_rotate %108 by %c4_i32_26 dim 0 : vector<8x512xf32>, i32 -> vector<8x512xf32>
    %110 = arith.mulf %108, %109 : vector<8x512xf32>
    %c2_i32_27 = arith.constant 2 : i32
    %111 = tpu.dynamic_rotate %110 by %c2_i32_27 dim 0 : vector<8x512xf32>, i32 -> vector<8x512xf32>
    %112 = arith.mulf %110, %111 : vector<8x512xf32>
    %c1_i32_28 = arith.constant 1 : i32
    %113 = tpu.dynamic_rotate %112 by %c1_i32_28 dim 0 : vector<8x512xf32>, i32 -> vector<8x512xf32>
    %114 = arith.mulf %112, %113 : vector<8x512xf32>
    %115 = vector.extract_strided_slice %114 {offsets = [0, 0], sizes = [1, 512], strides = [1, 1]} : vector<8x512xf32> to vector<1x512xf32>
    %116 = vector.extract_strided_slice %3 {offsets = [0, 3], sizes = [8, 1], strides = [1, 1]} : vector<8x4xf32> to vector<8x1xf32>
    %117 = vector.broadcast %116 : vector<8x1xf32> to vector<8x512xf32>
    %118 = arith.mulf %62, %117 : vector<8x512xf32>
    %119 = arith.addf %118, %66 : vector<8x512xf32>
    %c4_i32_29 = arith.constant 4 : i32
    %120 = tpu.dynamic_rotate %119 by %c4_i32_29 dim 0 : vector<8x512xf32>, i32 -> vector<8x512xf32>
    %121 = arith.mulf %119, %120 : vector<8x512xf32>
    %c2_i32_30 = arith.constant 2 : i32
    %122 = tpu.dynamic_rotate %121 by %c2_i32_30 dim 0 : vector<8x512xf32>, i32 -> vector<8x512xf32>
    %123 = arith.mulf %121, %122 : vector<8x512xf32>
    %c1_i32_31 = arith.constant 1 : i32
    %124 = tpu.dynamic_rotate %123 by %c1_i32_31 dim 0 : vector<8x512xf32>, i32 -> vector<8x512xf32>
    %125 = arith.mulf %123, %124 : vector<8x512xf32>
    %126 = vector.extract_strided_slice %125 {offsets = [0, 0], sizes = [1, 512], strides = [1, 1]} : vector<8x512xf32> to vector<1x512xf32>
    %127 = tpu.concatenate %93, %104, %115, %126 in 0 : vector<1x512xf32>, vector<1x512xf32>, vector<1x512xf32>, vector<1x512xf32> -> vector<4x512xf32>
    %128 = arith.addf %93, %104 : vector<1x512xf32>
    %129 = arith.addf %128, %115 : vector<1x512xf32>
    %130 = arith.addf %129, %126 : vector<1x512xf32>
    %cst_32 = arith.constant 3.000000e+00 : f32
    %131 = vector.broadcast %cst_32 : f32 to vector<1x512xf32>
    %132 = arith.mulf %131, %75 : vector<1x512xf32>
    %133 = arith.subf %130, %132 : vector<1x512xf32>
    %cst_33 = arith.constant 9.99999996E-13 : f32
    %134 = vector.broadcast %cst_33 : f32 to vector<1x512xf32>
    %135 = arith.addf %133, %134 : vector<1x512xf32>
    %cst_34 = arith.constant 1.000000e+00 : f32
    %136 = vector.broadcast %cst_34 : f32 to vector<1x512xf32>
    %137 = arith.divf %136, %135 : vector<1x512xf32>
    %138 = vector.broadcast %75 : vector<1x512xf32> to vector<4x512xf32>
    %139 = arith.subf %127, %138 : vector<4x512xf32>
    %140 = vector.broadcast %137 : vector<1x512xf32> to vector<4x512xf32>
    %141 = arith.mulf %140, %139 : vector<4x512xf32>
    %142 = arith.mulf %137, %82 : vector<1x512xf32>
    %cst_35 = arith.constant 1.000000e+00 : f32
    %143 = vector.broadcast %cst_35 : f32 to vector<1x512xf32>
    %144 = arith.subf %143, %142 : vector<1x512xf32>
    %cst_36 = arith.constant 9.99999996E-13 : f32
    %145 = vector.broadcast %cst_36 : f32 to vector<1x512xf32>
    %146 = arith.addf %144, %145 : vector<1x512xf32>
    %147 = vector.broadcast %146 : vector<1x512xf32> to vector<4x512xf32>
    %148 = arith.divf %141, %147 : vector<4x512xf32>
    %c0_37 = arith.constant 0 : index
    %c0_38 = arith.constant 0 : index
    %149 = vector.load %arg7[%c0_37, %c0_38] : memref<4x1024xf32, #tpu.memory_space<vmem>>, vector<4x512xf32>
    tpu.vector_store %arg7[%c0_37, %c0_38], %148 {strides = array<i32>} : memref<4x1024xf32, #tpu.memory_space<vmem>>, vector<4x512xf32>,
    %c0_39 = arith.constant 0 : index
    %c512 = arith.constant 512 : index
    %150 = vector.load %arg1[%c0_39, %c512] : memref<4x1024xf32, #tpu.memory_space<vmem>>, vector<4x512xf32>
    %cst_40 = arith.constant 0.000000e+00 : f32
    %151 = vector.broadcast %cst_40 : f32 to vector<8x512xf32>
    %152 = vector.extract_strided_slice %150 {offsets = [0, 0], sizes = [1, 512], strides = [1, 1]} : vector<4x512xf32> to vector<1x512xf32>
    %153 = vector.extract_strided_slice %0 {offsets = [0, 0], sizes = [8, 1], strides = [1, 1]} : vector<8x4xf32> to vector<8x1xf32>
    %154 = vector.broadcast %152 : vector<1x512xf32> to vector<8x512xf32>
    %155 = vector.broadcast %153 : vector<8x1xf32> to vector<8x512xf32>
    %156 = arith.subf %154, %155 : vector<8x512xf32>
    %157 = vector.extract_strided_slice %1 {offsets = [0, 0], sizes = [8, 1], strides = [1, 1]} : vector<8x4xf32> to vector<8x1xf32>
    %158 = vector.broadcast %157 : vector<8x1xf32> to vector<8x512xf32>
    %159 = arith.mulf %158, %156 : vector<8x512xf32>
    %160 = arith.mulf %159, %156 : vector<8x512xf32>
    %161 = arith.addf %151, %160 : vector<8x512xf32>
    %162 = vector.extract_strided_slice %150 {offsets = [1, 0], sizes = [1, 512], strides = [1, 1]} : vector<4x512xf32> to vector<1x512xf32>
    %163 = vector.extract_strided_slice %0 {offsets = [0, 1], sizes = [8, 1], strides = [1, 1]} : vector<8x4xf32> to vector<8x1xf32>
    %164 = vector.broadcast %162 : vector<1x512xf32> to vector<8x512xf32>
    %165 = vector.broadcast %163 : vector<8x1xf32> to vector<8x512xf32>
    %166 = arith.subf %164, %165 : vector<8x512xf32>
    %167 = vector.extract_strided_slice %1 {offsets = [0, 1], sizes = [8, 1], strides = [1, 1]} : vector<8x4xf32> to vector<8x1xf32>
    %168 = vector.broadcast %167 : vector<8x1xf32> to vector<8x512xf32>
    %169 = arith.mulf %168, %166 : vector<8x512xf32>
    %170 = arith.mulf %169, %166 : vector<8x512xf32>
    %171 = arith.addf %161, %170 : vector<8x512xf32>
    %172 = vector.extract_strided_slice %150 {offsets = [2, 0], sizes = [1, 512], strides = [1, 1]} : vector<4x512xf32> to vector<1x512xf32>
    %173 = vector.extract_strided_slice %0 {offsets = [0, 2], sizes = [8, 1], strides = [1, 1]} : vector<8x4xf32> to vector<8x1xf32>
    %174 = vector.broadcast %172 : vector<1x512xf32> to vector<8x512xf32>
    %175 = vector.broadcast %173 : vector<8x1xf32> to vector<8x512xf32>
    %176 = arith.subf %174, %175 : vector<8x512xf32>
    %177 = vector.extract_strided_slice %1 {offsets = [0, 2], sizes = [8, 1], strides = [1, 1]} : vector<8x4xf32> to vector<8x1xf32>
    %178 = vector.broadcast %177 : vector<8x1xf32> to vector<8x512xf32>
    %179 = arith.mulf %178, %176 : vector<8x512xf32>
    %180 = arith.mulf %179, %176 : vector<8x512xf32>
    %181 = arith.addf %171, %180 : vector<8x512xf32>
    %182 = vector.extract_strided_slice %150 {offsets = [3, 0], sizes = [1, 512], strides = [1, 1]} : vector<4x512xf32> to vector<1x512xf32>
    %183 = vector.extract_strided_slice %0 {offsets = [0, 3], sizes = [8, 1], strides = [1, 1]} : vector<8x4xf32> to vector<8x1xf32>
    %184 = vector.broadcast %182 : vector<1x512xf32> to vector<8x512xf32>
    %185 = vector.broadcast %183 : vector<8x1xf32> to vector<8x512xf32>
    %186 = arith.subf %184, %185 : vector<8x512xf32>
    %187 = vector.extract_strided_slice %1 {offsets = [0, 3], sizes = [8, 1], strides = [1, 1]} : vector<8x4xf32> to vector<8x1xf32>
    %188 = vector.broadcast %187 : vector<8x1xf32> to vector<8x512xf32>
    %189 = arith.mulf %188, %186 : vector<8x512xf32>
    %190 = arith.mulf %189, %186 : vector<8x512xf32>
    %191 = arith.addf %181, %190 : vector<8x512xf32>
    %cst_41 = arith.constant -5.000000e-01 : f32
    %192 = vector.broadcast %cst_41 : f32 to vector<8x512xf32>
    %193 = arith.mulf %191, %192 : vector<8x512xf32>
    %194 = vector.broadcast %2 : vector<8x1xf32> to vector<8x512xf32>
    %195 = arith.addf %193, %194 : vector<8x512xf32>
    %196 = math.exp %195 : vector<8x512xf32>
    %cst_42 = arith.constant dense<0.000000e+00> : vector<512xf32>
    %197 = vector.multi_reduction <add>, %196, %cst_42 [0] : vector<8x512xf32> to vector<512xf32>
    %198 = vector.shape_cast %197 : vector<512xf32> to vector<1x512xf32>
    %cst_43 = arith.constant 9.99999996E-13 : f32
    %199 = vector.broadcast %cst_43 : f32 to vector<1x512xf32>
    %200 = arith.addf %198, %199 : vector<1x512xf32>
    %201 = tpu.reciprocal %200 {approx = true} : vector<1x512xf32> -> vector<1x512xf32>
    %202 = arith.mulf %200, %201 : vector<1x512xf32>
    %cst_44 = arith.constant 2.000000e+00 : f32
    %203 = vector.broadcast %cst_44 : f32 to vector<1x512xf32>
    %204 = arith.subf %203, %202 : vector<1x512xf32>
    %205 = arith.mulf %201, %204 : vector<1x512xf32>
    %206 = vector.broadcast %205 : vector<1x512xf32> to vector<8x512xf32>
    %207 = arith.mulf %196, %206 : vector<8x512xf32>
    %208 = vector.broadcast %4 : vector<8x1xf32> to vector<8x512xf32>
    %209 = arith.mulf %207, %208 : vector<8x512xf32>
    %cst_45 = arith.constant 1.000000e+00 : f32
    %210 = vector.broadcast %cst_45 : f32 to vector<8x512xf32>
    %211 = arith.subf %210, %209 : vector<8x512xf32>
    %cst_46 = arith.constant 1.000000e+00 : f32
    %212 = vector.broadcast %cst_46 : f32 to vector<8x512xf32>
    %213 = arith.subf %212, %207 : vector<8x512xf32>
    %c4_i32_47 = arith.constant 4 : i32
    %214 = tpu.dynamic_rotate %211 by %c4_i32_47 dim 0 : vector<8x512xf32>, i32 -> vector<8x512xf32>
    %215 = arith.mulf %211, %214 : vector<8x512xf32>
    %c2_i32_48 = arith.constant 2 : i32
    %216 = tpu.dynamic_rotate %215 by %c2_i32_48 dim 0 : vector<8x512xf32>, i32 -> vector<8x512xf32>
    %217 = arith.mulf %215, %216 : vector<8x512xf32>
    %c1_i32_49 = arith.constant 1 : i32
    %218 = tpu.dynamic_rotate %217 by %c1_i32_49 dim 0 : vector<8x512xf32>, i32 -> vector<8x512xf32>
    %219 = arith.mulf %217, %218 : vector<8x512xf32>
    %220 = vector.extract_strided_slice %219 {offsets = [0, 0], sizes = [1, 512], strides = [1, 1]} : vector<8x512xf32> to vector<1x512xf32>
    %c4_i32_50 = arith.constant 4 : i32
    %221 = tpu.dynamic_rotate %213 by %c4_i32_50 dim 0 : vector<8x512xf32>, i32 -> vector<8x512xf32>
    %222 = arith.mulf %213, %221 : vector<8x512xf32>
    %c2_i32_51 = arith.constant 2 : i32
    %223 = tpu.dynamic_rotate %222 by %c2_i32_51 dim 0 : vector<8x512xf32>, i32 -> vector<8x512xf32>
    %224 = arith.mulf %222, %223 : vector<8x512xf32>
    %c1_i32_52 = arith.constant 1 : i32
    %225 = tpu.dynamic_rotate %224 by %c1_i32_52 dim 0 : vector<8x512xf32>, i32 -> vector<8x512xf32>
    %226 = arith.mulf %224, %225 : vector<8x512xf32>
    %227 = vector.extract_strided_slice %226 {offsets = [0, 0], sizes = [1, 512], strides = [1, 1]} : vector<8x512xf32> to vector<1x512xf32>
    %228 = vector.extract_strided_slice %3 {offsets = [0, 0], sizes = [8, 1], strides = [1, 1]} : vector<8x4xf32> to vector<8x1xf32>
    %229 = vector.broadcast %228 : vector<8x1xf32> to vector<8x512xf32>
    %230 = arith.mulf %207, %229 : vector<8x512xf32>
    %231 = arith.addf %230, %211 : vector<8x512xf32>
    %c4_i32_53 = arith.constant 4 : i32
    %232 = tpu.dynamic_rotate %231 by %c4_i32_53 dim 0 : vector<8x512xf32>, i32 -> vector<8x512xf32>
    %233 = arith.mulf %231, %232 : vector<8x512xf32>
    %c2_i32_54 = arith.constant 2 : i32
    %234 = tpu.dynamic_rotate %233 by %c2_i32_54 dim 0 : vector<8x512xf32>, i32 -> vector<8x512xf32>
    %235 = arith.mulf %233, %234 : vector<8x512xf32>
    %c1_i32_55 = arith.constant 1 : i32
    %236 = tpu.dynamic_rotate %235 by %c1_i32_55 dim 0 : vector<8x512xf32>, i32 -> vector<8x512xf32>
    %237 = arith.mulf %235, %236 : vector<8x512xf32>
    %238 = vector.extract_strided_slice %237 {offsets = [0, 0], sizes = [1, 512], strides = [1, 1]} : vector<8x512xf32> to vector<1x512xf32>
    %239 = vector.extract_strided_slice %3 {offsets = [0, 1], sizes = [8, 1], strides = [1, 1]} : vector<8x4xf32> to vector<8x1xf32>
    %240 = vector.broadcast %239 : vector<8x1xf32> to vector<8x512xf32>
    %241 = arith.mulf %207, %240 : vector<8x512xf32>
    %242 = arith.addf %241, %211 : vector<8x512xf32>
    %c4_i32_56 = arith.constant 4 : i32
    %243 = tpu.dynamic_rotate %242 by %c4_i32_56 dim 0 : vector<8x512xf32>, i32 -> vector<8x512xf32>
    %244 = arith.mulf %242, %243 : vector<8x512xf32>
    %c2_i32_57 = arith.constant 2 : i32
    %245 = tpu.dynamic_rotate %244 by %c2_i32_57 dim 0 : vector<8x512xf32>, i32 -> vector<8x512xf32>
    %246 = arith.mulf %244, %245 : vector<8x512xf32>
    %c1_i32_58 = arith.constant 1 : i32
    %247 = tpu.dynamic_rotate %246 by %c1_i32_58 dim 0 : vector<8x512xf32>, i32 -> vector<8x512xf32>
    %248 = arith.mulf %246, %247 : vector<8x512xf32>
    %249 = vector.extract_strided_slice %248 {offsets = [0, 0], sizes = [1, 512], strides = [1, 1]} : vector<8x512xf32> to vector<1x512xf32>
    %250 = vector.extract_strided_slice %3 {offsets = [0, 2], sizes = [8, 1], strides = [1, 1]} : vector<8x4xf32> to vector<8x1xf32>
    %251 = vector.broadcast %250 : vector<8x1xf32> to vector<8x512xf32>
    %252 = arith.mulf %207, %251 : vector<8x512xf32>
    %253 = arith.addf %252, %211 : vector<8x512xf32>
    %c4_i32_59 = arith.constant 4 : i32
    %254 = tpu.dynamic_rotate %253 by %c4_i32_59 dim 0 : vector<8x512xf32>, i32 -> vector<8x512xf32>
    %255 = arith.mulf %253, %254 : vector<8x512xf32>
    %c2_i32_60 = arith.constant 2 : i32
    %256 = tpu.dynamic_rotate %255 by %c2_i32_60 dim 0 : vector<8x512xf32>, i32 -> vector<8x512xf32>
    %257 = arith.mulf %255, %256 : vector<8x512xf32>
    %c1_i32_61 = arith.constant 1 : i32
    %258 = tpu.dynamic_rotate %257 by %c1_i32_61 dim 0 : vector<8x512xf32>, i32 -> vector<8x512xf32>
    %259 = arith.mulf %257, %258 : vector<8x512xf32>
    %260 = vector.extract_strided_slice %259 {offsets = [0, 0], sizes = [1, 512], strides = [1, 1]} : vector<8x512xf32> to vector<1x512xf32>
    %261 = vector.extract_strided_slice %3 {offsets = [0, 3], sizes = [8, 1], strides = [1, 1]} : vector<8x4xf32> to vector<8x1xf32>
    %262 = vector.broadcast %261 : vector<8x1xf32> to vector<8x512xf32>
    %263 = arith.mulf %207, %262 : vector<8x512xf32>
    %264 = arith.addf %263, %211 : vector<8x512xf32>
    %c4_i32_62 = arith.constant 4 : i32
    %265 = tpu.dynamic_rotate %264 by %c4_i32_62 dim 0 : vector<8x512xf32>, i32 -> vector<8x512xf32>
    %266 = arith.mulf %264, %265 : vector<8x512xf32>
    %c2_i32_63 = arith.constant 2 : i32
    %267 = tpu.dynamic_rotate %266 by %c2_i32_63 dim 0 : vector<8x512xf32>, i32 -> vector<8x512xf32>
    %268 = arith.mulf %266, %267 : vector<8x512xf32>
    %c1_i32_64 = arith.constant 1 : i32
    %269 = tpu.dynamic_rotate %268 by %c1_i32_64 dim 0 : vector<8x512xf32>, i32 -> vector<8x512xf32>
    %270 = arith.mulf %268, %269 : vector<8x512xf32>
    %271 = vector.extract_strided_slice %270 {offsets = [0, 0], sizes = [1, 512], strides = [1, 1]} : vector<8x512xf32> to vector<1x512xf32>
    %272 = tpu.concatenate %238, %249, %260, %271 in 0 : vector<1x512xf32>, vector<1x512xf32>, vector<1x512xf32>, vector<1x512xf32> -> vector<4x512xf32>
    %273 = arith.addf %238, %249 : vector<1x512xf32>
    %274 = arith.addf %273, %260 : vector<1x512xf32>
    %275 = arith.addf %274, %271 : vector<1x512xf32>
    %cst_65 = arith.constant 3.000000e+00 : f32
    %276 = vector.broadcast %cst_65 : f32 to vector<1x512xf32>
    %277 = arith.mulf %276, %220 : vector<1x512xf32>
    %278 = arith.subf %275, %277 : vector<1x512xf32>
    %cst_66 = arith.constant 9.99999996E-13 : f32
    %279 = vector.broadcast %cst_66 : f32 to vector<1x512xf32>
    %280 = arith.addf %278, %279 : vector<1x512xf32>
    %cst_67 = arith.constant 1.000000e+00 : f32
    %281 = vector.broadcast %cst_67 : f32 to vector<1x512xf32>
    %282 = arith.divf %281, %280 : vector<1x512xf32>
    %283 = vector.broadcast %220 : vector<1x512xf32> to vector<4x512xf32>
    %284 = arith.subf %272, %283 : vector<4x512xf32>
    %285 = vector.broadcast %282 : vector<1x512xf32> to vector<4x512xf32>
    %286 = arith.mulf %285, %284 : vector<4x512xf32>
    %287 = arith.mulf %282, %227 : vector<1x512xf32>
    %cst_68 = arith.constant 1.000000e+00 : f32
    %288 = vector.broadcast %cst_68 : f32 to vector<1x512xf32>
    %289 = arith.subf %288, %287 : vector<1x512xf32>
    %cst_69 = arith.constant 9.99999996E-13 : f32
    %290 = vector.broadcast %cst_69 : f32 to vector<1x512xf32>
    %291 = arith.addf %289, %290 : vector<1x512xf32>
    %292 = vector.broadcast %291 : vector<1x512xf32> to vector<4x512xf32>
    %293 = arith.divf %286, %292 : vector<4x512xf32>
    %c0_70 = arith.constant 0 : index
    %c512_71 = arith.constant 512 : index
    %294 = vector.load %arg7[%c0_70, %c512_71] : memref<4x1024xf32, #tpu.memory_space<vmem>>, vector<4x512xf32>
    tpu.vector_store %arg7[%c0_70, %c512_71], %293 {strides = array<i32>} : memref<4x1024xf32, #tpu.memory_space<vmem>>, vector<4x512xf32>,
    return
  }
  func.func @transform_0(%arg0: i32) -> (i32, i32) {
    %c0_i32 = arith.constant 0 : i32
    %c0_i32_0 = arith.constant 0 : i32
    return %c0_i32, %arg0 : i32, i32
  }
  func.func @transform_1(%arg0: i32) -> (i32, i32) {
    %c0_i32 = arith.constant 0 : i32
    %c0_i32_0 = arith.constant 0 : i32
    %c0_i32_1 = arith.constant 0 : i32
    return %c0_i32, %c0_i32_0 : i32, i32
  }
  func.func @transform_2(%arg0: i32) -> (i32, i32) {
    %c0_i32 = arith.constant 0 : i32
    %c0_i32_0 = arith.constant 0 : i32
    %c0_i32_1 = arith.constant 0 : i32
    return %c0_i32, %c0_i32_0 : i32, i32
  }
  func.func @transform_3(%arg0: i32) -> (i32, i32) {
    %c0_i32 = arith.constant 0 : i32
    %c0_i32_0 = arith.constant 0 : i32
    %c0_i32_1 = arith.constant 0 : i32
    return %c0_i32, %c0_i32_0 : i32, i32
  }
  func.func @transform_4(%arg0: i32) -> (i32, i32) {
    %c0_i32 = arith.constant 0 : i32
    %c0_i32_0 = arith.constant 0 : i32
    %c0_i32_1 = arith.constant 0 : i32
    return %c0_i32, %c0_i32_0 : i32, i32
  }
  func.func @transform_5(%arg0: i32) -> (i32, i32) {
    %c0_i32 = arith.constant 0 : i32
    %c0_i32_0 = arith.constant 0 : i32
    %c0_i32_1 = arith.constant 0 : i32
    return %c0_i32, %c0_i32_0 : i32, i32
  }
  func.func @transform_6(%arg0: i32) -> (i32, i32) {
    %c0_i32 = arith.constant 0 : i32
    %c0_i32_0 = arith.constant 0 : i32
    return %c0_i32, %arg0 : i32, i32
  }
}

</mosaic_0001>

<llo_original>
// kernel: tpu_custom_call.1
$region0: #{tpu_custom_call.1}
  #allocation0 [shape = 'u32[]', space=smem, size = 0x4, offset = 0x4, fixed_abs, tag = 'smem constant byte address 0x4 - core index']
  #allocation1 [shape = 'u32[144,128]{1,0:T(1,128)}', space=vmem, size = 0x12000, scoped, tag = 'internal scratch']
  %s0 = inlined_call_operand.hbm [shape: f32[4,2048], index: 0, kind: input, shape index: {}]
  %s1 = inlined_call_operand.vmem [shape: f32[8,4], index: 1, kind: input, shape index: {}]
  %s2 = inlined_call_operand.vmem [shape: f32[8,4], index: 2, kind: input, shape index: {}]
  %s3 = inlined_call_operand.vmem [shape: f32[8,1], index: 3, kind: input, shape index: {}]
  %s4 = inlined_call_operand.vmem [shape: f32[8,4], index: 4, kind: input, shape index: {}]
  %s5 = inlined_call_operand.vmem [shape: f32[8,1], index: 5, kind: input, shape index: {}]
  %s6 = inlined_call_operand.hbm [shape: f32[4,2048], index: 6, kind: output, shape index: {}]
  %s7 = sld [smem:[#allocation0]]
  $region61: #{tpu_custom_call.1} parent=0
    _
  %s9 = ssub.s32 1, %s7
  %s10 = scalar_select 0, %s9, %s7
  $region1: #{tpu_custom_call.1} parent=0
    #allocation2 [shape = 'u8[32768]{0}', space=vmem, size = 0x8000, scoped, tag = 'input window, operand 0']
    #allocation3 [shape = 's32[2]{0}', space=sflag, size = 0x8, scoped, tag = 'scoped memory for tpu_custom_call.1']
    #allocation4 [shape = 's32[2]{0}', space=sflag, size = 0x8, scoped, tag = 'scoped memory for tpu_custom_call.1']
    #allocation5 [shape = 'u8[32768]{0}', space=vmem, size = 0x8000, scoped, tag = 'output window, operand 0']
    %11 = vsyncpa [#allocation3], 0
    %s12 = scalar_lea.sflag [#allocation3], 1
    %13 = vsyncpa %s12, 0
    %14 = vsyncpa [#allocation4], 0
    %s15 = scalar_lea.sflag [#allocation4], 1
    %16 = vsyncpa %s15, 0
    loop: start=0, step=1, limit=4
    $region2: #{tpu_custom_call.1} parent=1 // loop_pre_header
      _
    $region3: #{tpu_custom_call.1} parent=1 // loop_header
      %s18 = sphi 0, %s22
      %p19 = scmp.ge.s32.totalorder %s18, 4
      %s28 = sphi 0, %s30
      %s31 = sphi 0, %s28
      %s32 = sphi 0, %s31
      %s48 = sphi 0, %s32
      %s52 = sphi 0, %s52
      %s54 = sphi 0, %s52
      %s55 = sphi 0, %s54
      %s69 = sphi 0, %s55
      %s73 = sphi 0, %s73
      %s75 = sphi 0, %s73
      %s76 = sphi 0, %s75
      %s90 = sphi 0, %s76
      %s94 = sphi 0, %s94
      %s96 = sphi 0, %s94
      %s97 = sphi 0, %s96
      %s111 = sphi 0, %s97
      %s115 = sphi 0, %s115
      %s117 = sphi 0, %s115
      %s118 = sphi 0, %s117
      %s132 = sphi 0, %s118
      %s136 = sphi 0, %s136
      %s138 = sphi 0, %s136
      %s139 = sphi 0, %s138
      %s153 = sphi 0, %s139
      %s159 = sphi 0, %s161
      %s162 = sphi 0, %s159
      %s163 = sphi 0, %s162
      %s179 = sphi 0, %s163
    $region4: #{tpu_custom_call.1} parent=1 // loop_header_branch
      %21 = sbr.rel (%p19) target = $region8
    $region5: #{tpu_custom_call.1} parent=1 // loop_body
      %s23 = ssub.s32 %s18, 1
      %s24 = ssub.s32 %s18, 2
      %s25 = sadd.s32 %s18, 1
      %s26 = ssub.s32 %s18, %s25
      %p27 = scmp.eq.s32.totalorder %s26, 0
      %s29 = sadd.s32 %s28, 1
      %s30 = scalar_select %p27, %s28, %s29
      %p33 = pneg %p27
      %p34 = scmp.eq.s32.totalorder %s18, 1
      %p35 = por %p33, %p34
      %p36 = scmp.ne.s32.totalorder %s28, %s31
      %p37 = scmp.eq.s32.totalorder %s18, 0
      %p38 = por %p36, %p37
      %p39 = scmp.ne.s32.totalorder %s28, %s31
      %p40 = scmp.eq.s32.totalorder %s23, 1
      %p41 = por %p39, %p40
      %p42 = scmp.ne.s32.totalorder %s31, %s32
      %p43 = scmp.eq.s32.totalorder %s23, 0
      %p44 = por %p42, %p43
      %p45 = scmp.ne.s32.totalorder %s31, %s32
      %p46 = scmp.eq.s32.totalorder %s24, 1
      %p47 = por %p45, %p46
      %p49 = scmp.ne.s32.totalorder %s32, %s48
      %p50 = scmp.eq.s32.totalorder %s24, 0
      %p51 = por %p49, %p50
      %s53 = sadd.s32 %s52, 1
      %p56 = scmp.eq.s32.totalorder %s18, 1
      %p57 = scmp.ne.s32.totalorder %s52, %s54
      %p58 = scmp.eq.s32.totalorder %s18, 0
      %p59 = por %p57, %p58
      %p60 = scmp.ne.s32.totalorder %s52, %s54
      %p61 = scmp.eq.s32.totalorder %s23, 1
      %p62 = por %p60, %p61
      %p63 = scmp.ne.s32.totalorder %s54, %s55
      %p64 = scmp.eq.s32.totalorder %s23, 0
      %p65 = por %p63, %p64
      %p66 = scmp.ne.s32.totalorder %s54, %s55
      %p67 = scmp.eq.s32.totalorder %s24, 1
      %p68 = por %p66, %p67
      %p70 = scmp.ne.s32.totalorder %s55, %s69
      %p71 = scmp.eq.s32.totalorder %s24, 0
      %p72 = por %p70, %p71
      %s74 = sadd.s32 %s73, 1
      %p77 = scmp.eq.s32.totalorder %s18, 1
      %p78 = scmp.ne.s32.totalorder %s73, %s75
      %p79 = scmp.eq.s32.totalorder %s18, 0
      %p80 = por %p78, %p79
      %p81 = scmp.ne.s32.totalorder %s73, %s75
      %p82 = scmp.eq.s32.totalorder %s23, 1
      %p83 = por %p81, %p82
      %p84 = scmp.ne.s32.totalorder %s75, %s76
      %p85 = scmp.eq.s32.totalorder %s23, 0
      %p86 = por %p84, %p85
      %p87 = scmp.ne.s32.totalorder %s75, %s76
      %p88 = scmp.eq.s32.totalorder %s24, 1
      %p89 = por %p87, %p88
      %p91 = scmp.ne.s32.totalorder %s76, %s90
      %p92 = scmp.eq.s32.totalorder %s24, 0
      %p93 = por %p91, %p92
      %s95 = sadd.s32 %s94, 1
      %p98 = scmp.eq.s32.totalorder %s18, 1
      %p99 = scmp.ne.s32.totalorder %s94, %s96
      %p100 = scmp.eq.s32.totalorder %s18, 0
      %p101 = por %p99, %p100
      %p102 = scmp.ne.s32.totalorder %s94, %s96
      %p103 = scmp.eq.s32.totalorder %s23, 1
      %p104 = por %p102, %p103
      %p105 = scmp.ne.s32.totalorder %s96, %s97
      %p106 = scmp.eq.s32.totalorder %s23, 0
      %p107 = por %p105, %p106
      %p108 = scmp.ne.s32.totalorder %s96, %s97
      %p109 = scmp.eq.s32.totalorder %s24, 1
      %p110 = por %p108, %p109
      %p112 = scmp.ne.s32.totalorder %s97, %s111
      %p113 = scmp.eq.s32.totalorder %s24, 0
      %p114 = por %p112, %p113
      %s116 = sadd.s32 %s115, 1
      %p119 = scmp.eq.s32.totalorder %s18, 1
      %p120 = scmp.ne.s32.totalorder %s115, %s117
      %p121 = scmp.eq.s32.totalorder %s18, 0
      %p122 = por %p120, %p121
      %p123 = scmp.ne.s32.totalorder %s115, %s117
      %p124 = scmp.eq.s32.totalorder %s23, 1
      %p125 = por %p123, %p124
      %p126 = scmp.ne.s32.totalorder %s117, %s118
      %p127 = scmp.eq.s32.totalorder %s23, 0
      %p128 = por %p126, %p127
      %p129 = scmp.ne.s32.totalorder %s117, %s118
      %p130 = scmp.eq.s32.totalorder %s24, 1
      %p131 = por %p129, %p130
      %p133 = scmp.ne.s32.totalorder %s118, %s132
      %p134 = scmp.eq.s32.totalorder %s24, 0
      %p135 = por %p133, %p134
      %s137 = sadd.s32 %s136, 1
      %p140 = scmp.eq.s32.totalorder %s18, 1
      %p141 = scmp.ne.s32.totalorder %s136, %s138
      %p142 = scmp.eq.s32.totalorder %s18, 0
      %p143 = por %p141, %p142
      %p144 = scmp.ne.s32.totalorder %s136, %s138
      %p145 = scmp.eq.s32.totalorder %s23, 1
      %p146 = por %p144, %p145
      %p147 = scmp.ne.s32.totalorder %s138, %s139
      %p148 = scmp.eq.s32.totalorder %s23, 0
      %p149 = por %p147, %p148
      %p150 = scmp.ne.s32.totalorder %s138, %s139
      %p151 = scmp.eq.s32.totalorder %s24, 1
      %p152 = por %p150, %p151
      %p154 = scmp.ne.s32.totalorder %s139, %s153
      %p155 = scmp.eq.s32.totalorder %s24, 0
      %p156 = por %p154, %p155
      %s157 = ssub.s32 %s18, %s25
      %p158 = scmp.eq.s32.totalorder %s157, 0
      %s160 = sadd.s32 %s159, 1
      %s161 = scalar_select %p158, %s159, %s160
      %p164 = pneg %p158
      %p165 = scmp.eq.s32.totalorder %s18, 1
      %p166 = por %p164, %p165
      %p167 = scmp.ne.s32.totalorder %s159, %s162
      %p168 = scmp.eq.s32.totalorder %s18, 0
      %p169 = por %p167, %p168
      %p170 = scmp.ne.s32.totalorder %s159, %s162
      %p171 = scmp.eq.s32.totalorder %s23, 1
      %p172 = por %p170, %p171
      %p173 = scmp.ne.s32.totalorder %s162, %s163
      %p174 = scmp.eq.s32.totalorder %s23, 0
      %p175 = por %p173, %p174
      %p176 = scmp.ne.s32.totalorder %s162, %s163
      %p177 = scmp.eq.s32.totalorder %s24, 1
      %p178 = por %p176, %p177
      %p180 = scmp.ne.s32.totalorder %s163, %s179
      %p181 = scmp.eq.s32.totalorder %s24, 0
      %p182 = por %p180, %p181
      %p183 = scmp.le.s32.totalorder 1, %s18
      %p184 = scmp.lt.s32.totalorder %s18, 3
      %p185 = pnand %p183, %p184
      %p186 = pneg %p185
      // Predicated region
      $region9: #{tpu_custom_call.1} parent=5 // pred_check
        _
      $region10: #{tpu_custom_call.1} parent=5 // pred_check_branch
        %188 = sbr.rel (%p185) target = $region12
      $region11: #{tpu_custom_call.1} parent=5 // pred_region
        %s189 = ssub.s32 %s18, 1
        // Predicated region
        $region13: #{tpu_custom_call.1} parent=11 // pred_check
          %p190 = pneg %p65
        $region14: #{tpu_custom_call.1} parent=11 // pred_check_branch
          %192 = sbr.rel (%p190) target = $region16
        $region15: #{tpu_custom_call.1} parent=11 // pred_region
          _
        $region16: #{tpu_custom_call.1} parent=11 // pred_fallthru
          _
        // Predicated region
        $region17: #{tpu_custom_call.1} parent=11 // pred_check
          %p193 = pneg %p86
        $region18: #{tpu_custom_call.1} parent=11 // pred_check_branch
          %195 = sbr.rel (%p193) target = $region20
        $region19: #{tpu_custom_call.1} parent=11 // pred_region
          _
        $region20: #{tpu_custom_call.1} parent=11 // pred_fallthru
          _
        // Predicated region
        $region21: #{tpu_custom_call.1} parent=11 // pred_check
          %p196 = pneg %p107
        $region22: #{tpu_custom_call.1} parent=11 // pred_check_branch
          %198 = sbr.rel (%p196) target = $region24
        $region23: #{tpu_custom_call.1} parent=11 // pred_region
          _
        $region24: #{tpu_custom_call.1} parent=11 // pred_fallthru
          _
        // Predicated region
        $region25: #{tpu_custom_call.1} parent=11 // pred_check
          %p199 = pneg %p128
        $region26: #{tpu_custom_call.1} parent=11 // pred_check_branch
          %201 = sbr.rel (%p199) target = $region28
        $region27: #{tpu_custom_call.1} parent=11 // pred_region
          _
        $region28: #{tpu_custom_call.1} parent=11 // pred_fallthru
          _
        // Predicated region
        $region29: #{tpu_custom_call.1} parent=11 // pred_check
          %p202 = pneg %p149
        $region30: #{tpu_custom_call.1} parent=11 // pred_check_branch
          %204 = sbr.rel (%p202) target = $region32
        $region31: #{tpu_custom_call.1} parent=11 // pred_region
          _
        $region32: #{tpu_custom_call.1} parent=11 // pred_fallthru
          _
      $region12: #{tpu_custom_call.1} parent=5 // pred_fallthru
        _
      %p205 = scmp.lt.s32.totalorder %s18, 2
      // Predicated region
      $region33: #{tpu_custom_call.1} parent=5 // pred_check
        %p206 = pneg %p205
      $region34: #{tpu_custom_call.1} parent=5 // pred_check_branch
        %208 = sbr.rel (%p206) target = $region36
      $region35: #{tpu_custom_call.1} parent=5 // pred_region
        // Predicated region
        $region37: #{tpu_custom_call.1} parent=35 // pred_check
          %p209 = pneg %p38
        $region38: #{tpu_custom_call.1} parent=35 // pred_check_branch
          %211 = sbr.rel (%p209) target = $region40
        $region39: #{tpu_custom_call.1} parent=35 // pred_region
          %s212 = sand.u32 %s28, 1
          %s213 = scalar_lea.sflag [#allocation3], %s212
          %s214 = sand.u32 %s28, 1
          %s215 = smul.addr %s214, 32
          %s216 = scalar_lea.vmem [#allocation2], %s215
          %s217 = smul.u32 8, %s18
          %s219 = ssub.s32 512, 512
          %220 = vsyncadd %s213, %s219
          %s221 = smul.addr %s217, 64
          %s222 = scalar_lea.hbm %s0, %s221
          %s224 = sshll.u32 %s216, 4
          %s225 = int_to_ptr.vmem [resolvable:$true] %s224
          %227 = dma.hbm_to_vmem [thread:$0]  %s222, 512, %s225, %s213
        $region40: #{tpu_custom_call.1} parent=35 // pred_fallthru
          _
      $region36: #{tpu_custom_call.1} parent=5 // pred_fallthru
        _
      %p228 = scmp.le.s32.totalorder 1, %s18
      %p229 = scmp.lt.s32.totalorder %s18, 3
      %p230 = pnand %p228, %p229
      %p231 = pneg %p230
      // Predicated region
      $region41: #{tpu_custom_call.1} parent=5 // pred_check
        _
      $region42: #{tpu_custom_call.1} parent=5 // pred_check_branch
        %233 = sbr.rel (%p230) target = $region44
      $region43: #{tpu_custom_call.1} parent=5 // pred_region
        %s234 = ssub.s32 %s18, 1
        %s235 = sand.u32 %s31, 1
        %s236 = scalar_lea.sflag [#allocation3], %s235
        %s237 = sand.u32 %s31, 1
        %s238 = smul.addr %s237, 32
        %s239 = scalar_lea.vmem [#allocation2], %s238
        // Predicated region
        $region45: #{tpu_custom_call.1} parent=43 // pred_check
          %p240 = pneg %p44
        $region46: #{tpu_custom_call.1} parent=43 // pred_check_branch
          %242 = sbr.rel (%p240) target = $region48
        $region47: #{tpu_custom_call.1} parent=43 // pred_region
          %243 = dma.done %s236, 512
        $region48: #{tpu_custom_call.1} parent=43 // pred_fallthru
          _
        %s244 = sand.u32 %s31, 1
        %s245 = scalar_lea.sflag [#allocation3], %s244
        %s246 = sand.u32 %s31, 1
        %s247 = smul.addr %s246, 32
        %s248 = scalar_lea.vmem [#allocation2], %s247
        %p249 = pneg %p44
        %p250 = pneg %p41
        %p251 = pneg %p65
        %p252 = pneg %p62
        %p253 = pneg %p86
        %p254 = pneg %p83
        %p255 = pneg %p107
        %p256 = pneg %p104
        %p257 = pneg %p128
        %p258 = pneg %p125
        %p259 = pneg %p149
        %p260 = pneg %p146
        %p261 = pneg %p175
        %p262 = pneg %p172
        %s263 = sand.u32 %s162, 1
        %s264 = scalar_lea.sflag [#allocation4], %s263
        %s265 = sand.u32 %s162, 1
        %s266 = smul.addr %s265, 32
        %s267 = scalar_lea.vmem [#allocation5], %s266
        %s268 = smul.u32 8, %s23
        %s269 = smul.u32 8, %s23
        %v270 = vld [vmem:[%s1] sm:$0xff]
        %v271 = vld [vmem:[%s2] sm:$0xff]
        %v272 = vld [vmem:[%s3] sm:$0xff]
        %v273 = vld [vmem:[%s4] sm:$0xff]
        %v274 = vld [vmem:[%s5] sm:$0xff]
        %v275 = vld [vmem:[%s239] sm:$0xff]
        %v276 = vld [vmem:[%s239 + $0x8] sm:$0xff]
        %v279 = vlaneseq
        %v280 = vshrl.u32 %v279, 7
        %v281 = vsub.s32 0, %v280
        %v282 = vrot.slane %v275, %v281
        %v283 = vlaneseq
        %v284 = vshrl.u32 %v283, 7
        %v285 = vsub.s32 4, %v284
        %v286 = vrot.slane %v275, %v285
        %v287 = vlaneseq
        %v288 = vshrl.u32 %v287, 7
        %v289 = vsub.s32 0, %v288
        %v290 = vrot.slane %v276, %v289
        %v291 = vlaneseq
        %v292 = vshrl.u32 %v291, 7
        %v293 = vsub.s32 4, %v292
        %v294 = vrot.slane %v276, %v293
        %v299 = vlaneseq
        %v300 = vshrl.u32 %v299, 7
        %v301 = vsub.s32 0, %v300
        %v302 = vrot.slane %v282, %v301
        %v303 = vlaneseq
        %v304 = vshrl.u32 %v303, 7
        %v305 = vsub.s32 0, %v304
        %v306 = vrot.slane %v286, %v305
        %v307 = vlaneseq
        %v308 = vshrl.u32 %v307, 7
        %v309 = vsub.s32 0, %v308
        %v310 = vrot.slane %v290, %v309
        %v311 = vlaneseq
        %v312 = vshrl.u32 %v311, 7
        %v313 = vsub.s32 0, %v312
        %v314 = vrot.slane %v294, %v313
        %316 = vset.pattern.permute.xlu0 0
        %317 = vperm.xlu0 %316, %v270
        %v318 = vpop.permute.xlu0 %317
        %v320 = vsub.f32 %v302, %v318
        %v321 = vsub.f32 %v306, %v318
        %v322 = vsub.f32 %v310, %v318
        %v323 = vsub.f32 %v314, %v318
        %325 = vset.pattern.permute.xlu0 0
        %326 = vperm.xlu0 %325, %v271
        %v327 = vpop.permute.xlu0 %326
        %v329 = vmul.f32 %v327, %v320
        %v330 = vmul.f32 %v327, %v321
        %v331 = vmul.f32 %v327, %v322
        %v332 = vmul.f32 %v327, %v323
        %v333 = vmul.f32 %v329, %v320
        %v334 = vmul.f32 %v330, %v321
        %v335 = vmul.f32 %v331, %v322
        %v336 = vmul.f32 %v332, %v323
        %v337 = vadd.f32 %v333, 0.0
        %v338 = vadd.f32 %v334, 0.0
        %v339 = vadd.f32 %v335, 0.0
        %v340 = vadd.f32 %v336, 0.0
        %v341 = vlaneseq
        %v342 = vshrl.u32 %v341, 7
        %v343 = vsub.s32 1, %v342
        %v344 = vrot.slane %v275, %v343
        %v345 = vlaneseq
        %v346 = vshrl.u32 %v345, 7
        %v347 = vsub.s32 5, %v346
        %v348 = vrot.slane %v275, %v347
        %v349 = vlaneseq
        %v350 = vshrl.u32 %v349, 7
        %v351 = vsub.s32 1, %v350
        %v352 = vrot.slane %v276, %v351
        %v353 = vlaneseq
        %v354 = vshrl.u32 %v353, 7
        %v355 = vsub.s32 5, %v354
        %v356 = vrot.slane %v276, %v355
        %v361 = vlaneseq
        %v362 = vshrl.u32 %v361, 7
        %v363 = vsub.s32 1, %v362
        %v364 = vrot.slane %v344, %v363
        %v365 = vlaneseq
        %v366 = vshrl.u32 %v365, 7
        %v367 = vsub.s32 1, %v366
        %v368 = vrot.slane %v348, %v367
        %v369 = vlaneseq
        %v370 = vshrl.u32 %v369, 7
        %v371 = vsub.s32 1, %v370
        %v372 = vrot.slane %v352, %v371
        %v373 = vlaneseq
        %v374 = vshrl.u32 %v373, 7
        %v375 = vsub.s32 1, %v374
        %v376 = vrot.slane %v356, %v375
        %377 = vset.pattern.permute.xlu0 1
        %378 = vperm.xlu0 %377, %v270
        %v379 = vpop.permute.xlu0 %378
        %v381 = vsub.f32 %v364, %v379
        %v382 = vsub.f32 %v368, %v379
        %v383 = vsub.f32 %v372, %v379
        %v384 = vsub.f32 %v376, %v379
        %385 = vset.pattern.permute.xlu0 1
        %386 = vperm.xlu0 %385, %v271
        %v387 = vpop.permute.xlu0 %386
        %v389 = vmul.f32 %v387, %v381
        %v390 = vmul.f32 %v387, %v382
        %v391 = vmul.f32 %v387, %v383
        %v392 = vmul.f32 %v387, %v384
        %v393 = vmul.f32 %v389, %v381
        %v394 = vmul.f32 %v390, %v382
        %v395 = vmul.f32 %v391, %v383
        %v396 = vmul.f32 %v392, %v384
        %v397 = vadd.f32 %v337, %v393
        %v398 = vadd.f32 %v338, %v394
        %v399 = vadd.f32 %v339, %v395
        %v400 = vadd.f32 %v340, %v396
        %v401 = vlaneseq
        %v402 = vshrl.u32 %v401, 7
        %v403 = vsub.s32 2, %v402
        %v404 = vrot.slane %v275, %v403
        %v405 = vlaneseq
        %v406 = vshrl.u32 %v405, 7
        %v407 = vsub.s32 6, %v406
        %v408 = vrot.slane %v275, %v407
        %v409 = vlaneseq
        %v410 = vshrl.u32 %v409, 7
        %v411 = vsub.s32 2, %v410
        %v412 = vrot.slane %v276, %v411
        %v413 = vlaneseq
        %v414 = vshrl.u32 %v413, 7
        %v415 = vsub.s32 6, %v414
        %v416 = vrot.slane %v276, %v415
        %v421 = vlaneseq
        %v422 = vshrl.u32 %v421, 7
        %v423 = vsub.s32 2, %v422
        %v424 = vrot.slane %v404, %v423
        %v425 = vlaneseq
        %v426 = vshrl.u32 %v425, 7
        %v427 = vsub.s32 2, %v426
        %v428 = vrot.slane %v408, %v427
        %v429 = vlaneseq
        %v430 = vshrl.u32 %v429, 7
        %v431 = vsub.s32 2, %v430
        %v432 = vrot.slane %v412, %v431
        %v433 = vlaneseq
        %v434 = vshrl.u32 %v433, 7
        %v435 = vsub.s32 2, %v434
        %v436 = vrot.slane %v416, %v435
        %437 = vset.pattern.permute.xlu0 2
        %438 = vperm.xlu0 %437, %v270
        %v439 = vpop.permute.xlu0 %438
        %v441 = vsub.f32 %v424, %v439
        %v442 = vsub.f32 %v428, %v439
        %v443 = vsub.f32 %v432, %v439
        %v444 = vsub.f32 %v436, %v439
        %445 = vset.pattern.permute.xlu0 2
        %446 = vperm.xlu0 %445, %v271
        %v447 = vpop.permute.xlu0 %446
        %v449 = vmul.f32 %v447, %v441
        %v450 = vmul.f32 %v447, %v442
        %v451 = vmul.f32 %v447, %v443
        %v452 = vmul.f32 %v447, %v444
        %v453 = vmul.f32 %v449, %v441
        %v454 = vmul.f32 %v450, %v442
        %v455 = vmul.f32 %v451, %v443
        %v456 = vmul.f32 %v452, %v444
        %v457 = vadd.f32 %v397, %v453
        %v458 = vadd.f32 %v398, %v454
        %v459 = vadd.f32 %v399, %v455
        %v460 = vadd.f32 %v400, %v456
        %v461 = vlaneseq
        %v462 = vshrl.u32 %v461, 7
        %v463 = vsub.s32 3, %v462
        %v464 = vrot.slane %v275, %v463
        %v465 = vlaneseq
        %v466 = vshrl.u32 %v465, 7
        %v467 = vsub.s32 7, %v466
        %v468 = vrot.slane %v275, %v467
        %v469 = vlaneseq
        %v470 = vshrl.u32 %v469, 7
        %v471 = vsub.s32 3, %v470
        %v472 = vrot.slane %v276, %v471
        %v473 = vlaneseq
        %v474 = vshrl.u32 %v473, 7
        %v475 = vsub.s32 7, %v474
        %v476 = vrot.slane %v276, %v475
        %v481 = vlaneseq
        %v482 = vshrl.u32 %v481, 7
        %v483 = vsub.s32 3, %v482
        %v484 = vrot.slane %v464, %v483
        %v485 = vlaneseq
        %v486 = vshrl.u32 %v485, 7
        %v487 = vsub.s32 3, %v486
        %v488 = vrot.slane %v468, %v487
        %v489 = vlaneseq
        %v490 = vshrl.u32 %v489, 7
        %v491 = vsub.s32 3, %v490
        %v492 = vrot.slane %v472, %v491
        %v493 = vlaneseq
        %v494 = vshrl.u32 %v493, 7
        %v495 = vsub.s32 3, %v494
        %v496 = vrot.slane %v476, %v495
        %497 = vset.pattern.permute.xlu0 3
        %498 = vperm.xlu0 %497, %v270
        %v499 = vpop.permute.xlu0 %498
        %v501 = vsub.f32 %v484, %v499
        %v502 = vsub.f32 %v488, %v499
        %v503 = vsub.f32 %v492, %v499
        %v504 = vsub.f32 %v496, %v499
        %505 = vset.pattern.permute.xlu0 3
        %506 = vperm.xlu0 %505, %v271
        %v507 = vpop.permute.xlu0 %506
        %v509 = vmul.f32 %v507, %v501
        %v510 = vmul.f32 %v507, %v502
        %v511 = vmul.f32 %v507, %v503
        %v512 = vmul.f32 %v507, %v504
        %v513 = vmul.f32 %v509, %v501
        %v514 = vmul.f32 %v510, %v502
        %v515 = vmul.f32 %v511, %v503
        %v516 = vmul.f32 %v512, %v504
        %v517 = vadd.f32 %v457, %v513
        %v518 = vadd.f32 %v458, %v514
        %v519 = vadd.f32 %v459, %v515
        %v520 = vadd.f32 %v460, %v516
        %v521 = vmul.f32 %v517, -0.5
        %v522 = vmul.f32 %v518, -0.5
        %v523 = vmul.f32 %v519, -0.5
        %v524 = vmul.f32 %v520, -0.5
        %526 = vset.pattern.permute.xlu0 0
        %527 = vperm.xlu0 %526, %v272
        %v528 = vpop.permute.xlu0 %527
        %v530 = vadd.f32 %v521, %v528
        %v531 = vadd.f32 %v522, %v528
        %v532 = vadd.f32 %v523, %v528
        %v533 = vadd.f32 %v524, %v528
        %v534 = vmul.f32 %v530, 1.442695
        %v535 = vpow.pop %v534
        %v536 = vmul.f32 %v531, 1.442695
        %v537 = vpow.pop %v536
        %v538 = vmul.f32 %v532, 1.442695
        %v539 = vpow.pop %v538
        %v540 = vmul.f32 %v533, 1.442695
        %v541 = vpow.pop %v540
        %v542 = vrot.slane %v535, 4
        %v543 = vadd.f32 %v535, %v542
        %v544 = vrot.slane %v543, 2
        %v545 = vadd.f32 %v543, %v544
        %v546 = vrot.slane %v545, 1
        %v547 = vadd.f32 %v545, %v546
        %v548 = vrot.slane %v537, 4
        %v549 = vadd.f32 %v537, %v548
        %v550 = vrot.slane %v549, 2
        %v551 = vadd.f32 %v549, %v550
        %v552 = vrot.slane %v551, 1
        %v553 = vadd.f32 %v551, %v552
        %v554 = vrot.slane %v539, 4
        %v555 = vadd.f32 %v539, %v554
        %v556 = vrot.slane %v555, 2
        %v557 = vadd.f32 %v555, %v556
        %v558 = vrot.slane %v557, 1
        %v559 = vadd.f32 %v557, %v558
        %v560 = vrot.slane %v541, 4
        %v561 = vadd.f32 %v541, %v560
        %v562 = vrot.slane %v561, 2
        %v563 = vadd.f32 %v561, %v562
        %v564 = vrot.slane %v563, 1
        %v565 = vadd.f32 %v563, %v564
        %v566 = vadd.f32 %v547, 1e-12
        %v567 = vadd.f32 %v553, 1e-12
        %v568 = vadd.f32 %v559, 1e-12
        %v569 = vadd.f32 %v565, 1e-12
        %v570 = vrcp.pop %v566
        %v571 = vrcp.pop %v567
        %v572 = vrcp.pop %v568
        %v573 = vrcp.pop %v569
        %v574 = vmul.f32 %v566, %v570
        %v575 = vmul.f32 %v567, %v571
        %v576 = vmul.f32 %v568, %v572
        %v577 = vmul.f32 %v569, %v573
        %v578 = vsub.f32 2.0, %v574
        %v579 = vsub.f32 2.0, %v575
        %v580 = vsub.f32 2.0, %v576
        %v581 = vsub.f32 2.0, %v577
        %v582 = vmul.f32 %v570, %v578
        %v583 = vmul.f32 %v571, %v579
        %v584 = vmul.f32 %v572, %v580
        %v585 = vmul.f32 %v573, %v581
        %v586 = vmul.f32 %v535, %v582
        %v587 = vmul.f32 %v537, %v583
        %v588 = vmul.f32 %v539, %v584
        %v589 = vmul.f32 %v541, %v585
        %591 = vset.pattern.permute.xlu0 0
        %592 = vperm.xlu0 %591, %v274
        %v593 = vpop.permute.xlu0 %592
        %v595 = vmul.f32 %v586, %v593
        %v596 = vmul.f32 %v587, %v593
        %v597 = vmul.f32 %v588, %v593
        %v598 = vmul.f32 %v589, %v593
        %v599 = vsub.f32 1.0, %v595
        %v600 = vsub.f32 1.0, %v596
        %v601 = vsub.f32 1.0, %v597
        %v602 = vsub.f32 1.0, %v598
        %v603 = vsub.f32 1.0, %v586
        %v604 = vsub.f32 1.0, %v587
        %v605 = vsub.f32 1.0, %v588
        %v606 = vsub.f32 1.0, %v589
        %v607 = vrot.slane %v599, 4
        %v608 = vrot.slane %v600, 4
        %v609 = vrot.slane %v601, 4
        %v610 = vrot.slane %v602, 4
        %v611 = vmul.f32 %v599, %v607
        %v612 = vmul.f32 %v600, %v608
        %v613 = vmul.f32 %v601, %v609
        %v614 = vmul.f32 %v602, %v610
        %v615 = vrot.slane %v611, 6
        %v616 = vrot.slane %v612, 6
        %v617 = vrot.slane %v613, 6
        %v618 = vrot.slane %v614, 6
        %v619 = vmul.f32 %v611, %v615
        %v620 = vmul.f32 %v612, %v616
        %v621 = vmul.f32 %v613, %v617
        %v622 = vmul.f32 %v614, %v618
        %v623 = vrot.slane %v619, 7
        %v624 = vrot.slane %v620, 7
        %v625 = vrot.slane %v621, 7
        %v626 = vrot.slane %v622, 7
        %v627 = vmul.f32 %v619, %v623
        %v628 = vmul.f32 %v620, %v624
        %v629 = vmul.f32 %v621, %v625
        %v630 = vmul.f32 %v622, %v626
        %v631 = vrot.slane %v603, 4
        %v632 = vrot.slane %v604, 4
        %v633 = vrot.slane %v605, 4
        %v634 = vrot.slane %v606, 4
        %v635 = vmul.f32 %v603, %v631
        %v636 = vmul.f32 %v604, %v632
        %v637 = vmul.f32 %v605, %v633
        %v638 = vmul.f32 %v606, %v634
        %v639 = vrot.slane %v635, 6
        %v640 = vrot.slane %v636, 6
        %v641 = vrot.slane %v637, 6
        %v642 = vrot.slane %v638, 6
        %v643 = vmul.f32 %v635, %v639
        %v644 = vmul.f32 %v636, %v640
        %v645 = vmul.f32 %v637, %v641
        %v646 = vmul.f32 %v638, %v642
        %v647 = vrot.slane %v643, 7
        %v648 = vrot.slane %v644, 7
        %v649 = vrot.slane %v645, 7
        %v650 = vrot.slane %v646, 7
        %v651 = vmul.f32 %v643, %v647
        %v652 = vmul.f32 %v644, %v648
        %v653 = vmul.f32 %v645, %v649
        %v654 = vmul.f32 %v646, %v650
        %656 = vset.pattern.permute.xlu0 0
        %657 = vperm.xlu0 %656, %v273
        %v658 = vpop.permute.xlu0 %657
        %v660 = vmul.f32 %v586, %v658
        %v661 = vmul.f32 %v587, %v658
        %v662 = vmul.f32 %v588, %v658
        %v663 = vmul.f32 %v589, %v658
        %v664 = vadd.f32 %v660, %v599
        %v665 = vadd.f32 %v661, %v600
        %v666 = vadd.f32 %v662, %v601
        %v667 = vadd.f32 %v663, %v602
        %v668 = vrot.slane %v664, 4
        %v669 = vrot.slane %v665, 4
        %v670 = vrot.slane %v666, 4
        %v671 = vrot.slane %v667, 4
        %v672 = vmul.f32 %v664, %v668
        %v673 = vmul.f32 %v665, %v669
        %v674 = vmul.f32 %v666, %v670
        %v675 = vmul.f32 %v667, %v671
        %v676 = vrot.slane %v672, 6
        %v677 = vrot.slane %v673, 6
        %v678 = vrot.slane %v674, 6
        %v679 = vrot.slane %v675, 6
        %v680 = vmul.f32 %v672, %v676
        %v681 = vmul.f32 %v673, %v677
        %v682 = vmul.f32 %v674, %v678
        %v683 = vmul.f32 %v675, %v679
        %v684 = vrot.slane %v680, 7
        %v685 = vrot.slane %v681, 7
        %v686 = vrot.slane %v682, 7
        %v687 = vrot.slane %v683, 7
        %v688 = vmul.f32 %v680, %v684
        %v689 = vmul.f32 %v681, %v685
        %v690 = vmul.f32 %v682, %v686
        %v691 = vmul.f32 %v683, %v687
        %692 = vset.pattern.permute.xlu0 1
        %693 = vperm.xlu0 %692, %v273
        %v694 = vpop.permute.xlu0 %693
        %v696 = vmul.f32 %v586, %v694
        %v697 = vmul.f32 %v587, %v694
        %v698 = vmul.f32 %v588, %v694
        %v699 = vmul.f32 %v589, %v694
        %v700 = vadd.f32 %v696, %v599
        %v701 = vadd.f32 %v697, %v600
        %v702 = vadd.f32 %v698, %v601
        %v703 = vadd.f32 %v699, %v602
        %v704 = vrot.slane %v700, 4
        %v705 = vrot.slane %v701, 4
        %v706 = vrot.slane %v702, 4
        %v707 = vrot.slane %v703, 4
        %v708 = vmul.f32 %v700, %v704
        %v709 = vmul.f32 %v701, %v705
        %v710 = vmul.f32 %v702, %v706
        %v711 = vmul.f32 %v703, %v707
        %v712 = vrot.slane %v708, 6
        %v713 = vrot.slane %v709, 6
        %v714 = vrot.slane %v710, 6
        %v715 = vrot.slane %v711, 6
        %v716 = vmul.f32 %v708, %v712
        %v717 = vmul.f32 %v709, %v713
        %v718 = vmul.f32 %v710, %v714
        %v719 = vmul.f32 %v711, %v715
        %v720 = vrot.slane %v716, 7
        %v721 = vrot.slane %v717, 7
        %v722 = vrot.slane %v718, 7
        %v723 = vrot.slane %v719, 7
        %v724 = vmul.f32 %v716, %v720
        %v725 = vmul.f32 %v717, %v721
        %v726 = vmul.f32 %v718, %v722
        %v727 = vmul.f32 %v719, %v723
        %728 = vset.pattern.permute.xlu0 2
        %729 = vperm.xlu0 %728, %v273
        %v730 = vpop.permute.xlu0 %729
        %v732 = vmul.f32 %v586, %v730
        %v733 = vmul.f32 %v587, %v730
        %v734 = vmul.f32 %v588, %v730
        %v735 = vmul.f32 %v589, %v730
        %v736 = vadd.f32 %v732, %v599
        %v737 = vadd.f32 %v733, %v600
        %v738 = vadd.f32 %v734, %v601
        %v739 = vadd.f32 %v735, %v602
        %v740 = vrot.slane %v736, 4
        %v741 = vrot.slane %v737, 4
        %v742 = vrot.slane %v738, 4
        %v743 = vrot.slane %v739, 4
        %v744 = vmul.f32 %v736, %v740
        %v745 = vmul.f32 %v737, %v741
        %v746 = vmul.f32 %v738, %v742
        %v747 = vmul.f32 %v739, %v743
        %v748 = vrot.slane %v744, 6
        %v749 = vrot.slane %v745, 6
        %v750 = vrot.slane %v746, 6
        %v751 = vrot.slane %v747, 6
        %v752 = vmul.f32 %v744, %v748
        %v753 = vmul.f32 %v745, %v749
        %v754 = vmul.f32 %v746, %v750
        %v755 = vmul.f32 %v747, %v751
        %v756 = vrot.slane %v752, 7
        %v757 = vrot.slane %v753, 7
        %v758 = vrot.slane %v754, 7
        %v759 = vrot.slane %v755, 7
        %v760 = vmul.f32 %v752, %v756
        %v761 = vmul.f32 %v753, %v757
        %v762 = vmul.f32 %v754, %v758
        %v763 = vmul.f32 %v755, %v759
        %764 = vset.pattern.permute.xlu0 3
        %765 = vperm.xlu0 %764, %v273
        %v766 = vpop.permute.xlu0 %765
        %v768 = vmul.f32 %v586, %v766
        %v769 = vmul.f32 %v587, %v766
        %v770 = vmul.f32 %v588, %v766
        %v771 = vmul.f32 %v589, %v766
        %v772 = vadd.f32 %v768, %v599
        %v773 = vadd.f32 %v769, %v600
        %v774 = vadd.f32 %v770, %v601
        %v775 = vadd.f32 %v771, %v602
        %v776 = vrot.slane %v772, 4
        %v777 = vrot.slane %v773, 4
        %v778 = vrot.slane %v774, 4
        %v779 = vrot.slane %v775, 4
        %v780 = vmul.f32 %v772, %v776
        %v781 = vmul.f32 %v773, %v777
        %v782 = vmul.f32 %v774, %v778
        %v783 = vmul.f32 %v775, %v779
        %v784 = vrot.slane %v780, 6
        %v785 = vrot.slane %v781, 6
        %v786 = vrot.slane %v782, 6
        %v787 = vrot.slane %v783, 6
        %v788 = vmul.f32 %v780, %v784
        %v789 = vmul.f32 %v781, %v785
        %v790 = vmul.f32 %v782, %v786
        %v791 = vmul.f32 %v783, %v787
        %v792 = vrot.slane %v788, 7
        %v793 = vrot.slane %v789, 7
        %v794 = vrot.slane %v790, 7
        %v795 = vrot.slane %v791, 7
        %v796 = vmul.f32 %v788, %v792
        %v797 = vmul.f32 %v789, %v793
        %v798 = vmul.f32 %v790, %v794
        %v799 = vmul.f32 %v791, %v795
        %v804 = vrot.slane %v724, 7
        %v805 = vrot.slane %v725, 7
        %v806 = vrot.slane %v726, 7
        %v807 = vrot.slane %v727, 7
        %v816 = vrot.slane %v760, 6
        %v817 = vrot.slane %v761, 6
        %v818 = vrot.slane %v762, 6
        %v819 = vrot.slane %v763, 6
        %v828 = vrot.slane %v796, 5
        %v829 = vrot.slane %v797, 5
        %v830 = vrot.slane %v798, 5
        %v831 = vrot.slane %v799, 5
        %vm836 = vcmask 1040384
        %v837 = vsel %vm836, %v688, %v804
        %v838 = vsel %vm836, %v689, %v805
        %v839 = vsel %vm836, %v690, %v806
        %v840 = vsel %vm836, %v691, %v807
        %vm841 = vcmask 1041408
        %v842 = vsel %vm841, %v837, %v816
        %v843 = vsel %vm841, %v838, %v817
        %v844 = vsel %vm841, %v839, %v818
        %v845 = vsel %vm841, %v840, %v819
        %vm846 = vcmask 1042432
        %v847 = vsel %vm846, %v842, %v828
        %v848 = vsel %vm846, %v843, %v829
        %v849 = vsel %vm846, %v844, %v830
        %v850 = vsel %vm846, %v845, %v831
        %v851 = vadd.f32 %v688, %v724
        %v852 = vadd.f32 %v689, %v725
        %v853 = vadd.f32 %v690, %v726
        %v854 = vadd.f32 %v691, %v727
        %v855 = vadd.f32 %v851, %v760
        %v856 = vadd.f32 %v852, %v761
        %v857 = vadd.f32 %v853, %v762
        %v858 = vadd.f32 %v854, %v763
        %v859 = vadd.f32 %v855, %v796
        %v860 = vadd.f32 %v856, %v797
        %v861 = vadd.f32 %v857, %v798
        %v862 = vadd.f32 %v858, %v799
        %v863 = vmul.f32 %v627, 3.0
        %v864 = vmul.f32 %v628, 3.0
        %v865 = vmul.f32 %v629, 3.0
        %v866 = vmul.f32 %v630, 3.0
        %v867 = vsub.f32 %v859, %v863
        %v868 = vsub.f32 %v860, %v864
        %v869 = vsub.f32 %v861, %v865
        %v870 = vsub.f32 %v862, %v866
        %v871 = vadd.f32 %v867, 1e-12
        %v872 = vadd.f32 %v868, 1e-12
        %v873 = vadd.f32 %v869, 1e-12
        %v874 = vadd.f32 %v870, 1e-12
        %v875 = vrcp.pop %v871
        %v876 = vmul.f32 1.0, %v875
        %v877 = vrcp.pop %v872
        %v878 = vmul.f32 1.0, %v877
        %v879 = vrcp.pop %v873
        %v880 = vmul.f32 1.0, %v879
        %v881 = vrcp.pop %v874
        %v882 = vmul.f32 1.0, %v881
        %v883 = vlaneseq
        %v884 = vshrl.u32 %v883, 7
        %v885 = vsub.s32 0, %v884
        %v886 = vrot.slane %v627, %v885
        %v887 = vlaneseq
        %v888 = vshrl.u32 %v887, 7
        %v889 = vsub.s32 0, %v888
        %v890 = vrot.slane %v628, %v889
        %v891 = vlaneseq
        %v892 = vshrl.u32 %v891, 7
        %v893 = vsub.s32 0, %v892
        %v894 = vrot.slane %v629, %v893
        %v895 = vlaneseq
        %v896 = vshrl.u32 %v895, 7
        %v897 = vsub.s32 0, %v896
        %v898 = vrot.slane %v630, %v897
        %v899 = vsub.f32 %v847, %v886
        %v900 = vsub.f32 %v848, %v890
        %v901 = vsub.f32 %v849, %v894
        %v902 = vsub.f32 %v850, %v898
        %v903 = vlaneseq
        %v904 = vshrl.u32 %v903, 7
        %v905 = vsub.s32 0, %v904
        %v906 = vrot.slane %v876, %v905
        %v907 = vlaneseq
        %v908 = vshrl.u32 %v907, 7
        %v909 = vsub.s32 0, %v908
        %v910 = vrot.slane %v878, %v909
        %v911 = vlaneseq
        %v912 = vshrl.u32 %v911, 7
        %v913 = vsub.s32 0, %v912
        %v914 = vrot.slane %v880, %v913
        %v915 = vlaneseq
        %v916 = vshrl.u32 %v915, 7
        %v917 = vsub.s32 0, %v916
        %v918 = vrot.slane %v882, %v917
        %v919 = vmul.f32 %v906, %v899
        %v920 = vmul.f32 %v910, %v900
        %v921 = vmul.f32 %v914, %v901
        %v922 = vmul.f32 %v918, %v902
        %v923 = vmul.f32 %v876, %v651
        %v924 = vmul.f32 %v878, %v652
        %v925 = vmul.f32 %v880, %v653
        %v926 = vmul.f32 %v882, %v654
        %v927 = vsub.f32 1.0, %v923
        %v928 = vsub.f32 1.0, %v924
        %v929 = vsub.f32 1.0, %v925
        %v930 = vsub.f32 1.0, %v926
        %v931 = vadd.f32 %v927, 1e-12
        %v932 = vadd.f32 %v928, 1e-12
        %v933 = vadd.f32 %v929, 1e-12
        %v934 = vadd.f32 %v930, 1e-12
        %v935 = vlaneseq
        %v936 = vshrl.u32 %v935, 7
        %v937 = vsub.s32 0, %v936
        %v938 = vrot.slane %v931, %v937
        %v939 = vlaneseq
        %v940 = vshrl.u32 %v939, 7
        %v941 = vsub.s32 0, %v940
        %v942 = vrot.slane %v932, %v941
        %v943 = vlaneseq
        %v944 = vshrl.u32 %v943, 7
        %v945 = vsub.s32 0, %v944
        %v946 = vrot.slane %v933, %v945
        %v947 = vlaneseq
        %v948 = vshrl.u32 %v947, 7
        %v949 = vsub.s32 0, %v948
        %v950 = vrot.slane %v934, %v949
        %v951 = vrcp.pop %v938
        %v952 = vmul.f32 %v919, %v951
        %v953 = vrcp.pop %v942
        %v954 = vmul.f32 %v920, %v953
        %v955 = vrcp.pop %v946
        %v956 = vmul.f32 %v921, %v955
        %v957 = vrcp.pop %v950
        %v958 = vmul.f32 %v922, %v957
        %v963 = vcombine.low %v952, %v954
        %v964 = vcombine.low %v956, %v958
        %967 = vst [vmem:[%s267] sm:$0xff] %v963
        %968 = vst [vmem:[%s267 + $0x8] sm:$0xff] %v964
        %v969 = vld [vmem:[%s239 + $0x10] sm:$0xff]
        %v970 = vld [vmem:[%s239 + $0x18] sm:$0xff]
        %v973 = vlaneseq
        %v974 = vshrl.u32 %v973, 7
        %v975 = vsub.s32 0, %v974
        %v976 = vrot.slane %v969, %v975
        %v977 = vlaneseq
        %v978 = vshrl.u32 %v977, 7
        %v979 = vsub.s32 4, %v978
        %v980 = vrot.slane %v969, %v979
        %v981 = vlaneseq
        %v982 = vshrl.u32 %v981, 7
        %v983 = vsub.s32 0, %v982
        %v984 = vrot.slane %v970, %v983
        %v985 = vlaneseq
        %v986 = vshrl.u32 %v985, 7
        %v987 = vsub.s32 4, %v986
        %v988 = vrot.slane %v970, %v987
        %v993 = vlaneseq
        %v994 = vshrl.u32 %v993, 7
        %v995 = vsub.s32 0, %v994
        %v996 = vrot.slane %v976, %v995
        %v997 = vlaneseq
        %v998 = vshrl.u32 %v997, 7
        %v999 = vsub.s32 0, %v998
        %v1000 = vrot.slane %v980, %v999
        %v1001 = vlaneseq
        %v1002 = vshrl.u32 %v1001, 7
        %v1003 = vsub.s32 0, %v1002
        %v1004 = vrot.slane %v984, %v1003
        %v1005 = vlaneseq
        %v1006 = vshrl.u32 %v1005, 7
        %v1007 = vsub.s32 0, %v1006
        %v1008 = vrot.slane %v988, %v1007
        %v1009 = vsub.f32 %v996, %v318
        %v1010 = vsub.f32 %v1000, %v318
        %v1011 = vsub.f32 %v1004, %v318
        %v1012 = vsub.f32 %v1008, %v318
        %v1013 = vmul.f32 %v327, %v1009
        %v1014 = vmul.f32 %v327, %v1010
        %v1015 = vmul.f32 %v327, %v1011
        %v1016 = vmul.f32 %v327, %v1012
        %v1017 = vmul.f32 %v1013, %v1009
        %v1018 = vmul.f32 %v1014, %v1010
        %v1019 = vmul.f32 %v1015, %v1011
        %v1020 = vmul.f32 %v1016, %v1012
        %v1021 = vadd.f32 %v1017, 0.0
        %v1022 = vadd.f32 %v1018, 0.0
        %v1023 = vadd.f32 %v1019, 0.0
        %v1024 = vadd.f32 %v1020, 0.0
        %v1025 = vlaneseq
        %v1026 = vshrl.u32 %v1025, 7
        %v1027 = vsub.s32 1, %v1026
        %v1028 = vrot.slane %v969, %v1027
        %v1029 = vlaneseq
        %v1030 = vshrl.u32 %v1029, 7
        %v1031 = vsub.s32 5, %v1030
        %v1032 = vrot.slane %v969, %v1031
        %v1033 = vlaneseq
        %v1034 = vshrl.u32 %v1033, 7
        %v1035 = vsub.s32 1, %v1034
        %v1036 = vrot.slane %v970, %v1035
        %v1037 = vlaneseq
        %v1038 = vshrl.u32 %v1037, 7
        %v1039 = vsub.s32 5, %v1038
        %v1040 = vrot.slane %v970, %v1039
        %v1045 = vlaneseq
        %v1046 = vshrl.u32 %v1045, 7
        %v1047 = vsub.s32 1, %v1046
        %v1048 = vrot.slane %v1028, %v1047
        %v1049 = vlaneseq
        %v1050 = vshrl.u32 %v1049, 7
        %v1051 = vsub.s32 1, %v1050
        %v1052 = vrot.slane %v1032, %v1051
        %v1053 = vlaneseq
        %v1054 = vshrl.u32 %v1053, 7
        %v1055 = vsub.s32 1, %v1054
        %v1056 = vrot.slane %v1036, %v1055
        %v1057 = vlaneseq
        %v1058 = vshrl.u32 %v1057, 7
        %v1059 = vsub.s32 1, %v1058
        %v1060 = vrot.slane %v1040, %v1059
        %v1061 = vsub.f32 %v1048, %v379
        %v1062 = vsub.f32 %v1052, %v379
        %v1063 = vsub.f32 %v1056, %v379
        %v1064 = vsub.f32 %v1060, %v379
        %v1065 = vmul.f32 %v387, %v1061
        %v1066 = vmul.f32 %v387, %v1062
        %v1067 = vmul.f32 %v387, %v1063
        %v1068 = vmul.f32 %v387, %v1064
        %v1069 = vmul.f32 %v1065, %v1061
        %v1070 = vmul.f32 %v1066, %v1062
        %v1071 = vmul.f32 %v1067, %v1063
        %v1072 = vmul.f32 %v1068, %v1064
        %v1073 = vadd.f32 %v1021, %v1069
        %v1074 = vadd.f32 %v1022, %v1070
        %v1075 = vadd.f32 %v1023, %v1071
        %v1076 = vadd.f32 %v1024, %v1072
        %v1077 = vlaneseq
        %v1078 = vshrl.u32 %v1077, 7
        %v1079 = vsub.s32 2, %v1078
        %v1080 = vrot.slane %v969, %v1079
        %v1081 = vlaneseq
        %v1082 = vshrl.u32 %v1081, 7
        %v1083 = vsub.s32 6, %v1082
        %v1084 = vrot.slane %v969, %v1083
        %v1085 = vlaneseq
        %v1086 = vshrl.u32 %v1085, 7
        %v1087 = vsub.s32 2, %v1086
        %v1088 = vrot.slane %v970, %v1087
        %v1089 = vlaneseq
        %v1090 = vshrl.u32 %v1089, 7
        %v1091 = vsub.s32 6, %v1090
        %v1092 = vrot.slane %v970, %v1091
        %v1097 = vlaneseq
        %v1098 = vshrl.u32 %v1097, 7
        %v1099 = vsub.s32 2, %v1098
        %v1100 = vrot.slane %v1080, %v1099
        %v1101 = vlaneseq
        %v1102 = vshrl.u32 %v1101, 7
        %v1103 = vsub.s32 2, %v1102
        %v1104 = vrot.slane %v1084, %v1103
        %v1105 = vlaneseq
        %v1106 = vshrl.u32 %v1105, 7
        %v1107 = vsub.s32 2, %v1106
        %v1108 = vrot.slane %v1088, %v1107
        %v1109 = vlaneseq
        %v1110 = vshrl.u32 %v1109, 7
        %v1111 = vsub.s32 2, %v1110
        %v1112 = vrot.slane %v1092, %v1111
        %v1113 = vsub.f32 %v1100, %v439
        %v1114 = vsub.f32 %v1104, %v439
        %v1115 = vsub.f32 %v1108, %v439
        %v1116 = vsub.f32 %v1112, %v439
        %v1117 = vmul.f32 %v447, %v1113
        %v1118 = vmul.f32 %v447, %v1114
        %v1119 = vmul.f32 %v447, %v1115
        %v1120 = vmul.f32 %v447, %v1116
        %v1121 = vmul.f32 %v1117, %v1113
        %v1122 = vmul.f32 %v1118, %v1114
        %v1123 = vmul.f32 %v1119, %v1115
        %v1124 = vmul.f32 %v1120, %v1116
        %v1125 = vadd.f32 %v1073, %v1121
        %v1126 = vadd.f32 %v1074, %v1122
        %v1127 = vadd.f32 %v1075, %v1123
        %v1128 = vadd.f32 %v1076, %v1124
        %v1129 = vlaneseq
        %v1130 = vshrl.u32 %v1129, 7
        %v1131 = vsub.s32 3, %v1130
        %v1132 = vrot.slane %v969, %v1131
        %v1133 = vlaneseq
        %v1134 = vshrl.u32 %v1133, 7
        %v1135 = vsub.s32 7, %v1134
        %v1136 = vrot.slane %v969, %v1135
        %v1137 = vlaneseq
        %v1138 = vshrl.u32 %v1137, 7
        %v1139 = vsub.s32 3, %v1138
        %v1140 = vrot.slane %v970, %v1139
        %v1141 = vlaneseq
        %v1142 = vshrl.u32 %v1141, 7
        %v1143 = vsub.s32 7, %v1142
        %v1144 = vrot.slane %v970, %v1143
        %v1149 = vlaneseq
        %v1150 = vshrl.u32 %v1149, 7
        %v1151 = vsub.s32 3, %v1150
        %v1152 = vrot.slane %v1132, %v1151
        %v1153 = vlaneseq
        %v1154 = vshrl.u32 %v1153, 7
        %v1155 = vsub.s32 3, %v1154
        %v1156 = vrot.slane %v1136, %v1155
        %v1157 = vlaneseq
        %v1158 = vshrl.u32 %v1157, 7
        %v1159 = vsub.s32 3, %v1158
        %v1160 = vrot.slane %v1140, %v1159
        %v1161 = vlaneseq
        %v1162 = vshrl.u32 %v1161, 7
        %v1163 = vsub.s32 3, %v1162
        %v1164 = vrot.slane %v1144, %v1163
        %v1165 = vsub.f32 %v1152, %v499
        %v1166 = vsub.f32 %v1156, %v499
        %v1167 = vsub.f32 %v1160, %v499
        %v1168 = vsub.f32 %v1164, %v499
        %v1169 = vmul.f32 %v507, %v1165
        %v1170 = vmul.f32 %v507, %v1166
        %v1171 = vmul.f32 %v507, %v1167
        %v1172 = vmul.f32 %v507, %v1168
        %v1173 = vmul.f32 %v1169, %v1165
        %v1174 = vmul.f32 %v1170, %v1166
        %v1175 = vmul.f32 %v1171, %v1167
        %v1176 = vmul.f32 %v1172, %v1168
        %v1177 = vadd.f32 %v1125, %v1173
        %v1178 = vadd.f32 %v1126, %v1174
        %v1179 = vadd.f32 %v1127, %v1175
        %v1180 = vadd.f32 %v1128, %v1176
        %v1181 = vmul.f32 %v1177, -0.5
        %v1182 = vmul.f32 %v1178, -0.5
        %v1183 = vmul.f32 %v1179, -0.5
        %v1184 = vmul.f32 %v1180, -0.5
        %v1185 = vadd.f32 %v1181, %v528
        %v1186 = vadd.f32 %v1182, %v528
        %v1187 = vadd.f32 %v1183, %v528
        %v1188 = vadd.f32 %v1184, %v528
        %v1189 = vmul.f32 %v1185, 1.442695
        %v1190 = vpow.pop %v1189
        %v1191 = vmul.f32 %v1186, 1.442695
        %v1192 = vpow.pop %v1191
        %v1193 = vmul.f32 %v1187, 1.442695
        %v1194 = vpow.pop %v1193
        %v1195 = vmul.f32 %v1188, 1.442695
        %v1196 = vpow.pop %v1195
        %v1197 = vrot.slane %v1190, 4
        %v1198 = vadd.f32 %v1190, %v1197
        %v1199 = vrot.slane %v1198, 2
        %v1200 = vadd.f32 %v1198, %v1199
        %v1201 = vrot.slane %v1200, 1
        %v1202 = vadd.f32 %v1200, %v1201
        %v1203 = vrot.slane %v1192, 4
        %v1204 = vadd.f32 %v1192, %v1203
        %v1205 = vrot.slane %v1204, 2
        %v1206 = vadd.f32 %v1204, %v1205
        %v1207 = vrot.slane %v1206, 1
        %v1208 = vadd.f32 %v1206, %v1207
        %v1209 = vrot.slane %v1194, 4
        %v1210 = vadd.f32 %v1194, %v1209
        %v1211 = vrot.slane %v1210, 2
        %v1212 = vadd.f32 %v1210, %v1211
        %v1213 = vrot.slane %v1212, 1
        %v1214 = vadd.f32 %v1212, %v1213
        %v1215 = vrot.slane %v1196, 4
        %v1216 = vadd.f32 %v1196, %v1215
        %v1217 = vrot.slane %v1216, 2
        %v1218 = vadd.f32 %v1216, %v1217
        %v1219 = vrot.slane %v1218, 1
        %v1220 = vadd.f32 %v1218, %v1219
        %v1221 = vadd.f32 %v1202, 1e-12
        %v1222 = vadd.f32 %v1208, 1e-12
        %v1223 = vadd.f32 %v1214, 1e-12
        %v1224 = vadd.f32 %v1220, 1e-12
        %v1225 = vrcp.pop %v1221
        %v1226 = vrcp.pop %v1222
        %v1227 = vrcp.pop %v1223
        %v1228 = vrcp.pop %v1224
        %v1229 = vmul.f32 %v1221, %v1225
        %v1230 = vmul.f32 %v1222, %v1226
        %v1231 = vmul.f32 %v1223, %v1227
        %v1232 = vmul.f32 %v1224, %v1228
        %v1233 = vsub.f32 2.0, %v1229
        %v1234 = vsub.f32 2.0, %v1230
        %v1235 = vsub.f32 2.0, %v1231
        %v1236 = vsub.f32 2.0, %v1232
        %v1237 = vmul.f32 %v1225, %v1233
        %v1238 = vmul.f32 %v1226, %v1234
        %v1239 = vmul.f32 %v1227, %v1235
        %v1240 = vmul.f32 %v1228, %v1236
        %v1241 = vmul.f32 %v1190, %v1237
        %v1242 = vmul.f32 %v1192, %v1238
        %v1243 = vmul.f32 %v1194, %v1239
        %v1244 = vmul.f32 %v1196, %v1240
        %v1245 = vmul.f32 %v1241, %v593
        %v1246 = vmul.f32 %v1242, %v593
        %v1247 = vmul.f32 %v1243, %v593
        %v1248 = vmul.f32 %v1244, %v593
        %v1249 = vsub.f32 1.0, %v1245
        %v1250 = vsub.f32 1.0, %v1246
        %v1251 = vsub.f32 1.0, %v1247
        %v1252 = vsub.f32 1.0, %v1248
        %v1253 = vsub.f32 1.0, %v1241
        %v1254 = vsub.f32 1.0, %v1242
        %v1255 = vsub.f32 1.0, %v1243
        %v1256 = vsub.f32 1.0, %v1244
        %v1257 = vrot.slane %v1249, 4
        %v1258 = vrot.slane %v1250, 4
        %v1259 = vrot.slane %v1251, 4
        %v1260 = vrot.slane %v1252, 4
        %v1261 = vmul.f32 %v1249, %v1257
        %v1262 = vmul.f32 %v1250, %v1258
        %v1263 = vmul.f32 %v1251, %v1259
        %v1264 = vmul.f32 %v1252, %v1260
        %v1265 = vrot.slane %v1261, 6
        %v1266 = vrot.slane %v1262, 6
        %v1267 = vrot.slane %v1263, 6
        %v1268 = vrot.slane %v1264, 6
        %v1269 = vmul.f32 %v1261, %v1265
        %v1270 = vmul.f32 %v1262, %v1266
        %v1271 = vmul.f32 %v1263, %v1267
        %v1272 = vmul.f32 %v1264, %v1268
        %v1273 = vrot.slane %v1269, 7
        %v1274 = vrot.slane %v1270, 7
        %v1275 = vrot.slane %v1271, 7
        %v1276 = vrot.slane %v1272, 7
        %v1277 = vmul.f32 %v1269, %v1273
        %v1278 = vmul.f32 %v1270, %v1274
        %v1279 = vmul.f32 %v1271, %v1275
        %v1280 = vmul.f32 %v1272, %v1276
        %v1281 = vrot.slane %v1253, 4
        %v1282 = vrot.slane %v1254, 4
        %v1283 = vrot.slane %v1255, 4
        %v1284 = vrot.slane %v1256, 4
        %v1285 = vmul.f32 %v1253, %v1281
        %v1286 = vmul.f32 %v1254, %v1282
        %v1287 = vmul.f32 %v1255, %v1283
        %v1288 = vmul.f32 %v1256, %v1284
        %v1289 = vrot.slane %v1285, 6
        %v1290 = vrot.slane %v1286, 6
        %v1291 = vrot.slane %v1287, 6
        %v1292 = vrot.slane %v1288, 6
        %v1293 = vmul.f32 %v1285, %v1289
        %v1294 = vmul.f32 %v1286, %v1290
        %v1295 = vmul.f32 %v1287, %v1291
        %v1296 = vmul.f32 %v1288, %v1292
        %v1297 = vrot.slane %v1293, 7
        %v1298 = vrot.slane %v1294, 7
        %v1299 = vrot.slane %v1295, 7
        %v1300 = vrot.slane %v1296, 7
        %v1301 = vmul.f32 %v1293, %v1297
        %v1302 = vmul.f32 %v1294, %v1298
        %v1303 = vmul.f32 %v1295, %v1299
        %v1304 = vmul.f32 %v1296, %v1300
        %v1305 = vmul.f32 %v1241, %v658
        %v1306 = vmul.f32 %v1242, %v658
        %v1307 = vmul.f32 %v1243, %v658
        %v1308 = vmul.f32 %v1244, %v658
        %v1309 = vadd.f32 %v1305, %v1249
        %v1310 = vadd.f32 %v1306, %v1250
        %v1311 = vadd.f32 %v1307, %v1251
        %v1312 = vadd.f32 %v1308, %v1252
        %v1313 = vrot.slane %v1309, 4
        %v1314 = vrot.slane %v1310, 4
        %v1315 = vrot.slane %v1311, 4
        %v1316 = vrot.slane %v1312, 4
        %v1317 = vmul.f32 %v1309, %v1313
        %v1318 = vmul.f32 %v1310, %v1314
        %v1319 = vmul.f32 %v1311, %v1315
        %v1320 = vmul.f32 %v1312, %v1316
        %v1321 = vrot.slane %v1317, 6
        %v1322 = vrot.slane %v1318, 6
        %v1323 = vrot.slane %v1319, 6
        %v1324 = vrot.slane %v1320, 6
        %v1325 = vmul.f32 %v1317, %v1321
        %v1326 = vmul.f32 %v1318, %v1322
        %v1327 = vmul.f32 %v1319, %v1323
        %v1328 = vmul.f32 %v1320, %v1324
        %v1329 = vrot.slane %v1325, 7
        %v1330 = vrot.slane %v1326, 7
        %v1331 = vrot.slane %v1327, 7
        %v1332 = vrot.slane %v1328, 7
        %v1333 = vmul.f32 %v1325, %v1329
        %v1334 = vmul.f32 %v1326, %v1330
        %v1335 = vmul.f32 %v1327, %v1331
        %v1336 = vmul.f32 %v1328, %v1332
        %v1337 = vmul.f32 %v1241, %v694
        %v1338 = vmul.f32 %v1242, %v694
        %v1339 = vmul.f32 %v1243, %v694
        %v1340 = vmul.f32 %v1244, %v694
        %v1341 = vadd.f32 %v1337, %v1249
        %v1342 = vadd.f32 %v1338, %v1250
        %v1343 = vadd.f32 %v1339, %v1251
        %v1344 = vadd.f32 %v1340, %v1252
        %v1345 = vrot.slane %v1341, 4
        %v1346 = vrot.slane %v1342, 4
        %v1347 = vrot.slane %v1343, 4
        %v1348 = vrot.slane %v1344, 4
        %v1349 = vmul.f32 %v1341, %v1345
        %v1350 = vmul.f32 %v1342, %v1346
        %v1351 = vmul.f32 %v1343, %v1347
        %v1352 = vmul.f32 %v1344, %v1348
        %v1353 = vrot.slane %v1349, 6
        %v1354 = vrot.slane %v1350, 6
        %v1355 = vrot.slane %v1351, 6
        %v1356 = vrot.slane %v1352, 6
        %v1357 = vmul.f32 %v1349, %v1353
        %v1358 = vmul.f32 %v1350, %v1354
        %v1359 = vmul.f32 %v1351, %v1355
        %v1360 = vmul.f32 %v1352, %v1356
        %v1361 = vrot.slane %v1357, 7
        %v1362 = vrot.slane %v1358, 7
        %v1363 = vrot.slane %v1359, 7
        %v1364 = vrot.slane %v1360, 7
        %v1365 = vmul.f32 %v1357, %v1361
        %v1366 = vmul.f32 %v1358, %v1362
        %v1367 = vmul.f32 %v1359, %v1363
        %v1368 = vmul.f32 %v1360, %v1364
        %v1369 = vmul.f32 %v1241, %v730
        %v1370 = vmul.f32 %v1242, %v730
        %v1371 = vmul.f32 %v1243, %v730
        %v1372 = vmul.f32 %v1244, %v730
        %v1373 = vadd.f32 %v1369, %v1249
        %v1374 = vadd.f32 %v1370, %v1250
        %v1375 = vadd.f32 %v1371, %v1251
        %v1376 = vadd.f32 %v1372, %v1252
        %v1377 = vrot.slane %v1373, 4
        %v1378 = vrot.slane %v1374, 4
        %v1379 = vrot.slane %v1375, 4
        %v1380 = vrot.slane %v1376, 4
        %v1381 = vmul.f32 %v1373, %v1377
        %v1382 = vmul.f32 %v1374, %v1378
        %v1383 = vmul.f32 %v1375, %v1379
        %v1384 = vmul.f32 %v1376, %v1380
        %v1385 = vrot.slane %v1381, 6
        %v1386 = vrot.slane %v1382, 6
        %v1387 = vrot.slane %v1383, 6
        %v1388 = vrot.slane %v1384, 6
        %v1389 = vmul.f32 %v1381, %v1385
        %v1390 = vmul.f32 %v1382, %v1386
        %v1391 = vmul.f32 %v1383, %v1387
        %v1392 = vmul.f32 %v1384, %v1388
        %v1393 = vrot.slane %v1389, 7
        %v1394 = vrot.slane %v1390, 7
        %v1395 = vrot.slane %v1391, 7
        %v1396 = vrot.slane %v1392, 7
        %v1397 = vmul.f32 %v1389, %v1393
        %v1398 = vmul.f32 %v1390, %v1394
        %v1399 = vmul.f32 %v1391, %v1395
        %v1400 = vmul.f32 %v1392, %v1396
        %v1401 = vmul.f32 %v1241, %v766
        %v1402 = vmul.f32 %v1242, %v766
        %v1403 = vmul.f32 %v1243, %v766
        %v1404 = vmul.f32 %v1244, %v766
        %v1405 = vadd.f32 %v1401, %v1249
        %v1406 = vadd.f32 %v1402, %v1250
        %v1407 = vadd.f32 %v1403, %v1251
        %v1408 = vadd.f32 %v1404, %v1252
        %v1409 = vrot.slane %v1405, 4
        %v1410 = vrot.slane %v1406, 4
        %v1411 = vrot.slane %v1407, 4
        %v1412 = vrot.slane %v1408, 4
        %v1413 = vmul.f32 %v1405, %v1409
        %v1414 = vmul.f32 %v1406, %v1410
        %v1415 = vmul.f32 %v1407, %v1411
        %v1416 = vmul.f32 %v1408, %v1412
        %v1417 = vrot.slane %v1413, 6
        %v1418 = vrot.slane %v1414, 6
        %v1419 = vrot.slane %v1415, 6
        %v1420 = vrot.slane %v1416, 6
        %v1421 = vmul.f32 %v1413, %v1417
        %v1422 = vmul.f32 %v1414, %v1418
        %v1423 = vmul.f32 %v1415, %v1419
        %v1424 = vmul.f32 %v1416, %v1420
        %v1425 = vrot.slane %v1421, 7
        %v1426 = vrot.slane %v1422, 7
        %v1427 = vrot.slane %v1423, 7
        %v1428 = vrot.slane %v1424, 7
        %v1429 = vmul.f32 %v1421, %v1425
        %v1430 = vmul.f32 %v1422, %v1426
        %v1431 = vmul.f32 %v1423, %v1427
        %v1432 = vmul.f32 %v1424, %v1428
        %v1437 = vrot.slane %v1365, 7
        %v1438 = vrot.slane %v1366, 7
        %v1439 = vrot.slane %v1367, 7
        %v1440 = vrot.slane %v1368, 7
        %v1449 = vrot.slane %v1397, 6
        %v1450 = vrot.slane %v1398, 6
        %v1451 = vrot.slane %v1399, 6
        %v1452 = vrot.slane %v1400, 6
        %v1461 = vrot.slane %v1429, 5
        %v1462 = vrot.slane %v1430, 5
        %v1463 = vrot.slane %v1431, 5
        %v1464 = vrot.slane %v1432, 5
        %v1469 = vsel %vm836, %v1333, %v1437
        %v1470 = vsel %vm836, %v1334, %v1438
        %v1471 = vsel %vm836, %v1335, %v1439
        %v1472 = vsel %vm836, %v1336, %v1440
        %v1473 = vsel %vm841, %v1469, %v1449
        %v1474 = vsel %vm841, %v1470, %v1450
        %v1475 = vsel %vm841, %v1471, %v1451
        %v1476 = vsel %vm841, %v1472, %v1452
        %v1477 = vsel %vm846, %v1473, %v1461
        %v1478 = vsel %vm846, %v1474, %v1462
        %v1479 = vsel %vm846, %v1475, %v1463
        %v1480 = vsel %vm846, %v1476, %v1464
        %v1481 = vadd.f32 %v1333, %v1365
        %v1482 = vadd.f32 %v1334, %v1366
        %v1483 = vadd.f32 %v1335, %v1367
        %v1484 = vadd.f32 %v1336, %v1368
        %v1485 = vadd.f32 %v1481, %v1397
        %v1486 = vadd.f32 %v1482, %v1398
        %v1487 = vadd.f32 %v1483, %v1399
        %v1488 = vadd.f32 %v1484, %v1400
        %v1489 = vadd.f32 %v1485, %v1429
        %v1490 = vadd.f32 %v1486, %v1430
        %v1491 = vadd.f32 %v1487, %v1431
        %v1492 = vadd.f32 %v1488, %v1432
        %v1493 = vmul.f32 %v1277, 3.0
        %v1494 = vmul.f32 %v1278, 3.0
        %v1495 = vmul.f32 %v1279, 3.0
        %v1496 = vmul.f32 %v1280, 3.0
        %v1497 = vsub.f32 %v1489, %v1493
        %v1498 = vsub.f32 %v1490, %v1494
        %v1499 = vsub.f32 %v1491, %v1495
        %v1500 = vsub.f32 %v1492, %v1496
        %v1501 = vadd.f32 %v1497, 1e-12
        %v1502 = vadd.f32 %v1498, 1e-12
        %v1503 = vadd.f32 %v1499, 1e-12
        %v1504 = vadd.f32 %v1500, 1e-12
        %v1505 = vrcp.pop %v1501
        %v1506 = vmul.f32 1.0, %v1505
        %v1507 = vrcp.pop %v1502
        %v1508 = vmul.f32 1.0, %v1507
        %v1509 = vrcp.pop %v1503
        %v1510 = vmul.f32 1.0, %v1509
        %v1511 = vrcp.pop %v1504
        %v1512 = vmul.f32 1.0, %v1511
        %v1513 = vlaneseq
        %v1514 = vshrl.u32 %v1513, 7
        %v1515 = vsub.s32 0, %v1514
        %v1516 = vrot.slane %v1277, %v1515
        %v1517 = vlaneseq
        %v1518 = vshrl.u32 %v1517, 7
        %v1519 = vsub.s32 0, %v1518
        %v1520 = vrot.slane %v1278, %v1519
        %v1521 = vlaneseq
        %v1522 = vshrl.u32 %v1521, 7
        %v1523 = vsub.s32 0, %v1522
        %v1524 = vrot.slane %v1279, %v1523
        %v1525 = vlaneseq
        %v1526 = vshrl.u32 %v1525, 7
        %v1527 = vsub.s32 0, %v1526
        %v1528 = vrot.slane %v1280, %v1527
        %v1529 = vsub.f32 %v1477, %v1516
        %v1530 = vsub.f32 %v1478, %v1520
        %v1531 = vsub.f32 %v1479, %v1524
        %v1532 = vsub.f32 %v1480, %v1528
        %v1533 = vlaneseq
        %v1534 = vshrl.u32 %v1533, 7
        %v1535 = vsub.s32 0, %v1534
        %v1536 = vrot.slane %v1506, %v1535
        %v1537 = vlaneseq
        %v1538 = vshrl.u32 %v1537, 7
        %v1539 = vsub.s32 0, %v1538
        %v1540 = vrot.slane %v1508, %v1539
        %v1541 = vlaneseq
        %v1542 = vshrl.u32 %v1541, 7
        %v1543 = vsub.s32 0, %v1542
        %v1544 = vrot.slane %v1510, %v1543
        %v1545 = vlaneseq
        %v1546 = vshrl.u32 %v1545, 7
        %v1547 = vsub.s32 0, %v1546
        %v1548 = vrot.slane %v1512, %v1547
        %v1549 = vmul.f32 %v1536, %v1529
        %v1550 = vmul.f32 %v1540, %v1530
        %v1551 = vmul.f32 %v1544, %v1531
        %v1552 = vmul.f32 %v1548, %v1532
        %v1553 = vmul.f32 %v1506, %v1301
        %v1554 = vmul.f32 %v1508, %v1302
        %v1555 = vmul.f32 %v1510, %v1303
        %v1556 = vmul.f32 %v1512, %v1304
        %v1557 = vsub.f32 1.0, %v1553
        %v1558 = vsub.f32 1.0, %v1554
        %v1559 = vsub.f32 1.0, %v1555
        %v1560 = vsub.f32 1.0, %v1556
        %v1561 = vadd.f32 %v1557, 1e-12
        %v1562 = vadd.f32 %v1558, 1e-12
        %v1563 = vadd.f32 %v1559, 1e-12
        %v1564 = vadd.f32 %v1560, 1e-12
        %v1565 = vlaneseq
        %v1566 = vshrl.u32 %v1565, 7
        %v1567 = vsub.s32 0, %v1566
        %v1568 = vrot.slane %v1561, %v1567
        %v1569 = vlaneseq
        %v1570 = vshrl.u32 %v1569, 7
        %v1571 = vsub.s32 0, %v1570
        %v1572 = vrot.slane %v1562, %v1571
        %v1573 = vlaneseq
        %v1574 = vshrl.u32 %v1573, 7
        %v1575 = vsub.s32 0, %v1574
        %v1576 = vrot.slane %v1563, %v1575
        %v1577 = vlaneseq
        %v1578 = vshrl.u32 %v1577, 7
        %v1579 = vsub.s32 0, %v1578
        %v1580 = vrot.slane %v1564, %v1579
        %v1581 = vrcp.pop %v1568
        %v1582 = vmul.f32 %v1549, %v1581
        %v1583 = vrcp.pop %v1572
        %v1584 = vmul.f32 %v1550, %v1583
        %v1585 = vrcp.pop %v1576
        %v1586 = vmul.f32 %v1551, %v1585
        %v1587 = vrcp.pop %v1580
        %v1588 = vmul.f32 %v1552, %v1587
        %v1593 = vcombine.low %v1582, %v1584
        %v1594 = vcombine.low %v1586, %v1588
        %1597 = vst [vmem:[%s267 + $0x10] sm:$0xff] %v1593
        %1598 = vst [vmem:[%s267 + $0x18] sm:$0xff] %v1594
        %s1599 = sand.u32 %s162, 1
        %s1600 = scalar_lea.sflag [#allocation4], %s1599
        %s1601 = sand.u32 %s162, 1
        %s1602 = smul.addr %s1601, 32
        %s1603 = scalar_lea.vmem [#allocation5], %s1602
        // Predicated region
        $region49: #{tpu_custom_call.1} parent=43 // pred_check
          %p1604 = pneg %p172
        $region50: #{tpu_custom_call.1} parent=43 // pred_check_branch
          %1606 = sbr.rel (%p1604) target = $region52
        $region51: #{tpu_custom_call.1} parent=43 // pred_region
          %s1607 = smul.u32 8, %s23
          %s1609 = ssub.s32 512, 512
          %1610 = vsyncadd %s1600, %s1609
          %s1611 = smul.addr %s1607, 64
          %s1612 = scalar_lea.hbm %s6, %s1611
          %s1614 = sshll.u32 %s1603, 4
          %s1615 = int_to_ptr.vmem [resolvable:$true] %s1614
          %1617 = dma.vmem_to_hbm [thread:$0]  %s1615, 512, %s1612, %s1600
        $region52: #{tpu_custom_call.1} parent=43 // pred_fallthru
          _
      $region44: #{tpu_custom_call.1} parent=5 // pred_fallthru
        _
      %p1618 = scmp.le.s32.totalorder 2, %s18
      // Predicated region
      $region53: #{tpu_custom_call.1} parent=5 // pred_check
        %p1619 = pneg %p1618
      $region54: #{tpu_custom_call.1} parent=5 // pred_check_branch
        %1621 = sbr.rel (%p1619) target = $region56
      $region55: #{tpu_custom_call.1} parent=5 // pred_region
        %s1622 = ssub.s32 %s18, 2
        // Predicated region
        $region57: #{tpu_custom_call.1} parent=55 // pred_check
          %p1623 = pneg %p178
        $region58: #{tpu_custom_call.1} parent=55 // pred_check_branch
          %1625 = sbr.rel (%p1623) target = $region60
        $region59: #{tpu_custom_call.1} parent=55 // pred_region
          %s1626 = sand.u32 %s163, 1
          %s1627 = scalar_lea.sflag [#allocation4], %s1626
          %s1628 = sand.u32 %s163, 1
          %s1629 = smul.addr %s1628, 32
          %s1630 = scalar_lea.vmem [#allocation5], %s1629
          %1631 = dma.done %s1627, 512
        $region60: #{tpu_custom_call.1} parent=55 // pred_fallthru
          _
      $region56: #{tpu_custom_call.1} parent=5 // pred_fallthru
        _
    $region6: #{tpu_custom_call.1} parent=1 // loop_footer
      %s22 = sadd.s32 1, %s18
    $region7: #{tpu_custom_call.1} parent=1 // loop_footer_branch
      %17 = sbr.rel target = $region3
    $region8: #{tpu_custom_call.1} parent=1 // loop_exit
      _
    %1632 = vsyncpa [#allocation3], 1
    %s1633 = scalar_lea.sflag [#allocation3], 1
    %1634 = vsyncpa %s1633, 1
    %1635 = vsyncpa [#allocation4], 1
    %s1636 = scalar_lea.sflag [#allocation4], 1
    %1637 = vsyncpa %s1636, 1

</llo_original>
